<compile_context>
chip_gen: v7x
topology: tpu7x:2x2x1
jax: 0.10.0
libtpu: 0.0.40
codegen_flags: <defaults>
</compile_context>

<pallas_src>
import jax
import jax.numpy as jnp
from jax.experimental import pallas as pl
from jax.experimental.pallas import tpu as pltpu


def _round_up(v, m):
    return ((v + m - 1) // m) * m


def attn_net_kernel(x_ref, w1_ref, b1_ref, w2_ref, b2_ref, a_ref, acc_ref):
    # x_ref : (tile_n, tile_l)  x.dtype          -- pipelined row/K tile
    # w1_ref: (tile_l, D)       x.dtype          -- pipelined K chunk of W1 (torch W1.T)
    # b1_ref: (1, D)            f32              -- untiled VMEM resident
    # w2_ref: (C, D)            f32              -- untiled VMEM resident (torch (out,in))
    # b2_ref: (C, 1)            f32              -- untiled VMEM resident
    # a_ref : (C, tile_n)       f32              -- lane-dense transposed output block
    # acc_ref: (tile_n, D)      f32 VMEM scratch -- x @ W1 accumulator across K steps
    k = pl.program_id(1)

    @pl.when(k == 0)
    def _():
        acc_ref[...] = jnp.zeros_like(acc_ref)

    acc_ref[...] += jnp.dot(x_ref[...], w1_ref[...],
                            preferred_element_type=jnp.float32)

    @pl.when(k == pl.num_programs(1) - 1)
    def _():
        h = jnp.tanh(acc_ref[...] + b1_ref[...])            # (tile_n, D) f32
        # NT contraction: (C, D) x (tile_n, D) contracting on D -> (C, tile_n).
        # Avoids materializing h.T through the XLU (shared slot with MXU pushes).
        scores = jax.lax.dot_general(
            w2_ref[...], h,
            dimension_numbers=(((1,), (1,)), ((), ())),
            preferred_element_type=jnp.float32)
        a_ref[...] = (scores + b2_ref[...]).astype(a_ref.dtype)   # single vectorized store


def attn_net_forward(x, w1, b1, w2, b2, *, tile_n=1024, max_tile_l=None):
    """Pallas implementation of Attn_Net.forward.

    x : (N, L); w1 : (L, D) [= torch W1.T]; b1 : (D,) or (1, D);
    w2 : (C, D) [= torch W2, (out,in)]; b2 : (C,).
    Returns (A: (N, C) float32, x passed through).
    """
    N, L = x.shape
    D = w1.shape[1]
    C = w2.shape[0]
    itemsize = jnp.dtype(x.dtype).itemsize

    # ---- Row (N) tile: multiple of 128 so the transposed (C, tile_n) output block is
    # lane-dense (unmasked stores); capped so (a) tiny bags don't over-allocate VMEM and
    # (b) the row grid keeps >= 2 blocks so both v7x TensorCores get work.
    requested = _round_up(max(tile_n, 128), 128)
    cap_size = _round_up(max(N, 1), 128)
    cap_occupancy = _round_up(pl.cdiv(max(N, 1), 2), 128)
    tile_n = max(128, min(requested, cap_size, cap_occupancy))

    # ---- Contraction (L) tile: keep the double-buffered x block <= ~8 MiB so the whole
    # kernel (~x 8 MiB + W1 chunk ~2 MiB + acc ~1 MiB + params) fits v5e's 16 MiB scoped
    # default without flags, and well inside v6e/v7x defaults.
    if max_tile_l is None:
        x_block_budget = 8 * 1024 * 1024
        max_tile_l = max(128, (x_block_budget // (2 * tile_n * itemsize)) // 128 * 128)
    if L <= max_tile_l:
        tile_l = L
    else:
        tile_l = L  # fallback: single K step if no clean 128-multiple divisor exists
        t = (max_tile_l // 128) * 128
        while t >= 128:
            if L % t == 0:
                tile_l = t
                break
            t -= 128
        # TODO(synk): L > budget and not divisible by any 128-multiple falls back to a
        # single (tile_n, L) block; a ragged K split would feed unmasked pad into the MXU.

    grid = (pl.cdiv(N, tile_n), L // tile_l)

    w1 = w1.astype(x.dtype)                         # MXU streaming dtype follows x (bf16-friendly)
    b1 = jnp.asarray(b1, jnp.float32).reshape(1, D)
    w2 = jnp.asarray(w2, jnp.float32).reshape(C, D)
    b2 = jnp.asarray(b2, jnp.float32).reshape(C, 1)

    cost = pl.CostEstimate(
        flops=2 * N * L * D + 2 * N * D * C,
        transcendentals=N * D,
        bytes_accessed=N * L * itemsize + grid[0] * L * D * itemsize
        + (D + C * D + C) * 4 + N * C * 4,
    )

    a_t = pl.pallas_call(
        attn_net_kernel,
        out_shape=jax.ShapeDtypeStruct((C, N), jnp.float32),        # A always f32
        grid_spec=pltpu.PrefetchScalarGridSpec(
            num_scalar_prefetch=0,
            grid=grid,
            in_specs=[
                pl.BlockSpec((tile_n, tile_l), lambda i, k: (i, k)),   # x row/K tile (pipelined)
                pl.BlockSpec((tile_l, D), lambda i, k: (k, 0)),        # W1 K chunk
                pl.BlockSpec(memory_space=pltpu.MemorySpace.VMEM),     # b1 resident
                pl.BlockSpec(memory_space=pltpu.MemorySpace.VMEM),     # W2 resident
                pl.BlockSpec(memory_space=pltpu.MemorySpace.VMEM),     # b2 resident (C,1)
            ],
            out_specs=pl.BlockSpec((C, tile_n), lambda i, k: (0, i)),  # lane-dense A^T tile
            scratch_shapes=[pltpu.VMEM((tile_n, D), jnp.float32)],     # x@W1 accumulator
        ),
        compiler_params=pltpu.CompilerParams(
            dimension_semantics=("parallel", "arbitrary")),
        cost_estimate=cost,
    )(x, w1, b1, w2, b2)

    # PyTorch forward returns (attention_scores, x) -- x is passed through untouched.
    return a_t.T, x


def _reference(xv, w1v, b1v, w2v, b2v):
    xf = xv.astype(jnp.float32)
    w1f = jnp.asarray(w1v).astype(xv.dtype).astype(jnp.float32)  # mirror the kernel's W1 cast
    b1f = jnp.asarray(b1v, jnp.float32).reshape(1, -1)
    w2f = jnp.asarray(w2v, jnp.float32)
    b2f = jnp.asarray(b2v, jnp.float32).reshape(1, -1)
    return jnp.tanh(xf @ w1f + b1f) @ w2f.T + b2f


if __name__ == "__main__":
    # Module defaults: L=1024, D=256, n_classes=1; small instance bags.
    L, D, C = 1024, 256, 1
    key = jax.random.PRNGKey(0)
    kx1, kx2, kx3, kw1, kb1, kw2, kb2, kw2m, kb2m = jax.random.split(key, 9)

    # Deterministic synthetic parameters (no checkpoint load).
    w1 = jax.random.normal(kw1, (L, D), jnp.float32) * (1.0 / jnp.sqrt(L))   # (in,out) = torch W1.T
    b1 = jax.random.normal(kb1, (1, D), jnp.float32) * 0.01
    w2 = jax.random.normal(kw2, (C, D), jnp.float32) * (1.0 / jnp.sqrt(D))   # torch (out,in)
    b2 = jax.random.normal(kb2, (C,), jnp.float32) * 0.01

    # TPU matmuls (XLA reference and MXU kernel) may use bf16 passes at default precision;
    # real bugs are O(0.1-1) off, so a 3e-2 tolerance cleanly separates them.
    TOL = 3e-2

    # Case 1: f32 x, bag size NOT a multiple of the tile (exercises ragged-row masking).
    N1 = 300
    x1 = jax.random.normal(kx1, (N1, L), jnp.float32)
    a1, x1_out = attn_net_forward(x1, w1, b1, w2, b2)
    jax.block_until_ready((a1, x1_out))
    assert a1.shape == (N1, C) and a1.dtype == jnp.float32 and x1_out.shape == (N1, L)
    assert jnp.allclose(a1, _reference(x1, w1, b1, w2, b2), atol=TOL, rtol=TOL)
    assert jnp.array_equal(x1_out, x1)

    # Case 2: bf16 x streaming (halves HBM traffic), multi-row-tile grid; A stays f32.
    N2 = 1024
    x2 = jax.random.normal(kx2, (N2, L), jnp.float32).astype(jnp.bfloat16)
    a2, _ = attn_net_forward(x2, w1, b1, w2, b2)
    jax.block_until_ready(a2)
    assert a2.shape == (N2, C) and a2.dtype == jnp.float32
    assert jnp.allclose(a2, _reference(x2, w1, b1, w2, b2), atol=TOL, rtol=TOL)

    # Case 3: multi-class head (C=3, vectorized bias store) + forced K-split over L
    # (max_tile_l=512 -> 2 K steps) to exercise the accumulator init/finalize path.
    N3, C3 = 256, 3
    x3 = jax.random.normal(kx3, (N3, L), jnp.float32)
    w2m = jax.random.normal(kw2m, (C3, D), jnp.float32) * (1.0 / jnp.sqrt(D))
    b2m = jax.random.normal(kb2m, (C3,), jnp.float32) * 0.01
    a3, _ = attn_net_forward(x3, w1, b1, w2m, b2m, max_tile_l=512)
    jax.block_until_ready(a3)
    assert a3.shape == (N3, C3)
    assert jnp.allclose(a3, _reference(x3, w1, b1, w2m, b2m), atol=TOL, rtol=TOL)

    print("KERNEL_OK")
</pallas_src>

<mosaic_0001>
module attributes {stable_mosaic.version = 11 : i64} {
  func.func @attn_net_kernel(%arg0: i32, %arg1: i32, %arg2: memref<256x1024xf32, #tpu.memory_space<vmem>>, %arg3: memref<1024x256xf32, #tpu.memory_space<vmem>>, %arg4: memref<1x256xf32, #tpu.memory_space<vmem>>, %arg5: memref<1x256xf32, #tpu.memory_space<vmem>>, %arg6: memref<1x1xf32, #tpu.memory_space<vmem>>, %arg7: memref<1x256xf32, #tpu.memory_space<vmem>>, %arg8: memref<256x256xf32, #tpu.memory_space<vmem>>) attributes {dimension_semantics = [#tpu.dimension_semantics<parallel>, #tpu.dimension_semantics<arbitrary>], iteration_bounds = array<i64: 2, 1>, scalar_prefetch = 0 : i64, scratch_operands = 1 : i64, tpu.core_type = #tpu.core_type<tc>, window_params = [{transform_indices = @transform_0, window_bounds = array<i64: 256, 1024>}, {transform_indices = @transform_1, window_bounds = array<i64: 1024, 256>}, {pipeline_mode = #tpu.pipeline_mode<synchronous>, transform_indices = @transform_2, window_bounds = array<i64: 1, 256>}, {pipeline_mode = #tpu.pipeline_mode<synchronous>, transform_indices = @transform_3, window_bounds = array<i64: 1, 256>}, {pipeline_mode = #tpu.pipeline_mode<synchronous>, transform_indices = @transform_4, window_bounds = array<i64: 1, 1>}, {transform_indices = @transform_5, window_bounds = array<i64: 1, 256>}]} {
    %c0_i32 = arith.constant 0 : i32
    %0 = arith.cmpi eq, %arg1, %c0_i32 : i32
    %1 = arith.extui %0 : i1 to i32
    %c0_i32_0 = arith.constant 0 : i32
    %2 = arith.cmpi ne, %1, %c0_i32_0 : i32
    scf.if %2 {
      %cst_10 = arith.constant 0.000000e+00 : f32
      %12 = vector.broadcast %cst_10 : f32 to vector<256x256xf32>
      %c0_11 = arith.constant 0 : index
      %c0_12 = arith.constant 0 : index
      %13 = vector.load %arg8[%c0_11, %c0_12] : memref<256x256xf32, #tpu.memory_space<vmem>>, vector<256x256xf32>
      tpu.vector_store %arg8[%c0_11, %c0_12], %12 {strides = array<i32>} : memref<256x256xf32, #tpu.memory_space<vmem>>, vector<256x256xf32>,
    } else {
    }
    %c0 = arith.constant 0 : index
    %c0_1 = arith.constant 0 : index
    %3 = vector.load %arg8[%c0, %c0_1] : memref<256x256xf32, #tpu.memory_space<vmem>>, vector<256x256xf32>
    %c0_2 = arith.constant 0 : index
    %c0_3 = arith.constant 0 : index
    %4 = vector.load %arg2[%c0_2, %c0_3] : memref<256x1024xf32, #tpu.memory_space<vmem>>, vector<256x1024xf32>
    %c0_4 = arith.constant 0 : index
    %c0_5 = arith.constant 0 : index
    %5 = vector.load %arg3[%c0_4, %c0_5] : memref<1024x256xf32, #tpu.memory_space<vmem>>, vector<1024x256xf32>
    %cst = arith.constant dense<0.000000e+00> : vector<256x256xf32>
    %6 = tpu.matmul %4, %5, %cst {dimension_numbers = #tpu.dot_dimension_numbers<[1], [0], [0], [1], [0, 0, 1, 1], [], []>} : vector<256x1024xf32>, vector<1024x256xf32>, vector<256x256xf32> -> vector<256x256xf32>
    %7 = arith.addf %3, %6 : vector<256x256xf32>
    %c0_6 = arith.constant 0 : index
    %c0_7 = arith.constant 0 : index
    %8 = vector.load %arg8[%c0_6, %c0_7] : memref<256x256xf32, #tpu.memory_space<vmem>>, vector<256x256xf32>
    tpu.vector_store %arg8[%c0_6, %c0_7], %7 {strides = array<i32>} : memref<256x256xf32, #tpu.memory_space<vmem>>, vector<256x256xf32>,
    %c0_i32_8 = arith.constant 0 : i32
    %9 = arith.cmpi eq, %arg1, %c0_i32_8 : i32
    %10 = arith.extui %9 : i1 to i32
    %c0_i32_9 = arith.constant 0 : i32
    %11 = arith.cmpi ne, %10, %c0_i32_9 : i32
    scf.if %11 {
      %c0_10 = arith.constant 0 : index
      %c0_11 = arith.constant 0 : index
      %12 = vector.load %arg8[%c0_10, %c0_11] : memref<256x256xf32, #tpu.memory_space<vmem>>, vector<256x256xf32>
      %c0_12 = arith.constant 0 : index
      %c0_13 = arith.constant 0 : index
      %13 = vector.load %arg4[%c0_12, %c0_13] : memref<1x256xf32, #tpu.memory_space<vmem>>, vector<1x256xf32>
      %14 = vector.broadcast %13 : vector<1x256xf32> to vector<256x256xf32>
      %15 = arith.addf %12, %14 : vector<256x256xf32>
      %16 = math.tanh %15 : vector<256x256xf32>
      %c0_14 = arith.constant 0 : index
      %c0_15 = arith.constant 0 : index
      %17 = vector.load %arg5[%c0_14, %c0_15] : memref<1x256xf32, #tpu.memory_space<vmem>>, vector<1x256xf32>
      %cst_16 = arith.constant dense<0.000000e+00> : vector<1x256xf32>
      %18 = tpu.matmul %17, %16, %cst_16 {dimension_numbers = #tpu.dot_dimension_numbers<[1], [1], [0], [0], [0, 0, 1, 0], [], []>} : vector<1x256xf32>, vector<256x256xf32>, vector<1x256xf32> -> vector<1x256xf32>
      %c0_17 = arith.constant 0 : index
      %c0_18 = arith.constant 0 : index
      %19 = vector.load %arg6[%c0_17, %c0_18] : memref<1x1xf32, #tpu.memory_space<vmem>>, vector<1x1xf32>
      %20 = vector.broadcast %19 : vector<1x1xf32> to vector<1x256xf32>
      %21 = arith.addf %18, %20 : vector<1x256xf32>
      %c0_19 = arith.constant 0 : index
      %c0_20 = arith.constant 0 : index
      %22 = vector.load %arg7[%c0_19, %c0_20] : memref<1x256xf32, #tpu.memory_space<vmem>>, vector<1x256xf32>
      tpu.vector_store %arg7[%c0_19, %c0_20], %21 {strides = array<i32>} : memref<1x256xf32, #tpu.memory_space<vmem>>, vector<1x256xf32>,
    } else {
    }
    return
  }
  func.func @transform_0(%arg0: i32, %arg1: i32) -> (i32, i32) {
    %c0_i32 = arith.constant 0 : i32
    return %arg0, %arg1 : i32, i32
  }
  func.func @transform_1(%arg0: i32, %arg1: i32) -> (i32, i32) {
    %c0_i32 = arith.constant 0 : i32
    %c0_i32_0 = arith.constant 0 : i32
    return %arg1, %c0_i32 : i32, i32
  }
  func.func @transform_2(%arg0: i32, %arg1: i32) -> (i32, i32) {
    %c0_i32 = arith.constant 0 : i32
    %c0_i32_0 = arith.constant 0 : i32
    %c0_i32_1 = arith.constant 0 : i32
    return %c0_i32, %c0_i32_0 : i32, i32
  }
  func.func @transform_3(%arg0: i32, %arg1: i32) -> (i32, i32) {
    %c0_i32 = arith.constant 0 : i32
    %c0_i32_0 = arith.constant 0 : i32
    %c0_i32_1 = arith.constant 0 : i32
    return %c0_i32, %c0_i32_0 : i32, i32
  }
  func.func @transform_4(%arg0: i32, %arg1: i32) -> (i32, i32) {
    %c0_i32 = arith.constant 0 : i32
    %c0_i32_0 = arith.constant 0 : i32
    %c0_i32_1 = arith.constant 0 : i32
    return %c0_i32, %c0_i32_0 : i32, i32
  }
  func.func @transform_5(%arg0: i32, %arg1: i32) -> (i32, i32) {
    %c0_i32 = arith.constant 0 : i32
    %c0_i32_0 = arith.constant 0 : i32
    return %c0_i32, %arg0 : i32, i32
  }
}

</mosaic_0001>

<llo_original>
// kernel: tpu_custom_call.1
$region0: #{tpu_custom_call.1}
  #allocation0 [shape = 'u32[]', space=smem, size = 0x4, offset = 0x4, fixed_abs, tag = 'smem constant byte address 0x4 - core index']
  #allocation1 [shape = 'u32[144,128]{1,0:T(1,128)}', space=vmem, size = 0x12000, scoped, tag = 'internal scratch']
  #allocation2 [shape = 'f32[256,256]{1,0:T(8,128)}', space=vmem, size = 0x40000, scoped, tag = 'scratch operand']
  #allocation3 [shape = 'f32[1,1]{1,0:T(1,128)S(1)}', space=vmem, size = 0x200, scoped, tag = 'scoped memory for tpu_custom_call.1']
  %s0 = inlined_call_operand.hbm [shape: f32[300,1024], index: 0, kind: input, shape index: {}]
  %s1 = inlined_call_operand.hbm [shape: f32[1024,256], index: 1, kind: input, shape index: {}]
  %s2 = inlined_call_operand.hbm [shape: f32[1,256], index: 2, kind: input, shape index: {}]
  %s3 = inlined_call_operand.hbm [shape: f32[1,256], index: 3, kind: input, shape index: {}]
  %s4 = inlined_call_operand.<no memory space> [shape: f32[1,1], index: 4, kind: input, shape index: {}]
  %s5 = inlined_call_operand.hbm [shape: f32[1,300], index: 5, kind: output, shape index: {}]
  %s6 = sld [smem:[#allocation0]]
  $region77: #{tpu_custom_call.1} parent=0
    _
  %s8 = ssub.s32 1, %s6
  %s9 = scalar_select 0, %s8, %s6
  %v10 = vstv %s4
  %11 = vst [vmem:[#allocation3] sm:$0x1] %v10
  $region1: #{tpu_custom_call.1} parent=0
    #allocation4 [shape = 'u8[2097152]{0}', space=vmem, size = 0x200000, scoped, tag = 'input window, operand 0']
    #allocation5 [shape = 's32[2]{0}', space=sflag, size = 0x8, scoped, tag = 'scoped memory for tpu_custom_call.1']
    #allocation6 [shape = 's32[2]{0}', space=sflag, size = 0x8, scoped, tag = 'scoped memory for tpu_custom_call.1']
    #allocation7 [shape = 'u8[1048576]{0}', space=vmem, size = 0x100000, scoped, tag = 'input window, operand 1, single buffered']
    #allocation8 [shape = 's32[1]{0}', space=sflag, size = 0x4, scoped, tag = 'scoped memory for tpu_custom_call.1']
    #allocation9 [shape = 'u8[1024]{0}', space=vmem, size = 0x400, scoped, tag = 'input window, operand 2, single buffered']
    #allocation10 [shape = 'u8[1024]{0}', space=vmem, size = 0x400, scoped, tag = 'input window, operand 3, single buffered']
    #allocation11 [shape = 's32[1]{0}', space=sflag, size = 0x4, scoped, tag = 'scoped memory for tpu_custom_call.1']
    #allocation12 [shape = 'u8[2048]{0}', space=vmem, size = 0x800, scoped, tag = 'output window, operand 0']
    %12 = vsyncpa [#allocation5], 0
    %s13 = scalar_lea.sflag [#allocation5], 1
    %14 = vsyncpa %s13, 0
    %15 = vsyncpa [#allocation8], 0
    %16 = vsyncpa [#allocation11], 0
    %17 = vsyncpa [#allocation6], 0
    %s18 = scalar_lea.sflag [#allocation6], 1
    %19 = vsyncpa %s18, 0
    loop: start=0, step=1, limit=4
    $region2: #{tpu_custom_call.1} parent=1 // loop_pre_header
      _
    $region3: #{tpu_custom_call.1} parent=1 // loop_header
      %s21 = sphi 0, %s25
      %p22 = scmp.ge.s32.totalorder %s21, 4
      %s28 = sphi 0, %s40
      %s29 = sphi 0, %s36
      %s30 = sphi 0, %s28
      %s31 = sphi 0, %s29
      %s32 = sphi 0, %s30
      %s33 = sphi 0, %s31
      %s45 = sphi 0, %s47
      %s48 = sphi 0, %s45
      %s49 = sphi 0, %s48
      %s65 = sphi 0, %s49
      %s71 = sphi 0, %s73
      %s74 = sphi 0, %s71
      %s75 = sphi 0, %s74
      %s91 = sphi 0, %s75
      %s95 = sphi 0, %s95
      %s97 = sphi 0, %s95
      %s98 = sphi 0, %s97
      %s112 = sphi 0, %s98
      %s116 = sphi 0, %s116
      %s118 = sphi 0, %s116
      %s119 = sphi 0, %s118
      %s133 = sphi 0, %s119
      %s137 = sphi 0, %s137
      %s139 = sphi 0, %s137
      %s140 = sphi 0, %s139
      %s154 = sphi 0, %s140
      %s160 = sphi 0, %s162
      %s163 = sphi 0, %s160
      %s164 = sphi 0, %s163
      %s180 = sphi 0, %s164
    $region4: #{tpu_custom_call.1} parent=1 // loop_header_branch
      %24 = sbr.rel (%p22) target = $region8
    $region5: #{tpu_custom_call.1} parent=1 // loop_body
      %s26 = ssub.s32 %s21, 1
      %s27 = ssub.s32 %s21, 2
      %s34 = sadd.s32 1, %s29
      %p35 = scmp.ge.s32.totalorder %s34, 1
      %s36 = scalar_select %p35, 0, %s34
      %s37 = sadd.s32 1, %s28
      %s38 = scalar_select %p35, %s37, %s28
      %p39 = scmp.ge.s32.totalorder %s38, 2
      %s40 = scalar_select %p39, 0, %s38
      %s41 = ssub.s32 %s28, %s40
      %s42 = ssub.s32 %s29, %s36
      %s43 = sor.u32 %s41, %s42
      %p44 = scmp.eq.s32.totalorder %s43, 0
      %s46 = sadd.s32 %s45, 1
      %s47 = scalar_select %p44, %s45, %s46
      %p50 = pneg %p44
      %p51 = scmp.eq.s32.totalorder %s21, 1
      %p52 = por %p50, %p51
      %p53 = scmp.ne.s32.totalorder %s45, %s48
      %p54 = scmp.eq.s32.totalorder %s21, 0
      %p55 = por %p53, %p54
      %p56 = scmp.ne.s32.totalorder %s45, %s48
      %p57 = scmp.eq.s32.totalorder %s26, 1
      %p58 = por %p56, %p57
      %p59 = scmp.ne.s32.totalorder %s48, %s49
      %p60 = scmp.eq.s32.totalorder %s26, 0
      %p61 = por %p59, %p60
      %p62 = scmp.ne.s32.totalorder %s48, %s49
      %p63 = scmp.eq.s32.totalorder %s27, 1
      %p64 = por %p62, %p63
      %p66 = scmp.ne.s32.totalorder %s49, %s65
      %p67 = scmp.eq.s32.totalorder %s27, 0
      %p68 = por %p66, %p67
      %s69 = ssub.s32 %s29, %s36
      %p70 = scmp.eq.s32.totalorder %s69, 0
      %s72 = sadd.s32 %s71, 1
      %s73 = scalar_select %p70, %s71, %s72
      %p76 = pneg %p70
      %p77 = scmp.eq.s32.totalorder %s21, 1
      %p78 = por %p76, %p77
      %p79 = scmp.ne.s32.totalorder %s71, %s74
      %p80 = scmp.eq.s32.totalorder %s21, 0
      %p81 = por %p79, %p80
      %p82 = scmp.ne.s32.totalorder %s71, %s74
      %p83 = scmp.eq.s32.totalorder %s26, 1
      %p84 = por %p82, %p83
      %p85 = scmp.ne.s32.totalorder %s74, %s75
      %p86 = scmp.eq.s32.totalorder %s26, 0
      %p87 = por %p85, %p86
      %p88 = scmp.ne.s32.totalorder %s74, %s75
      %p89 = scmp.eq.s32.totalorder %s27, 1
      %p90 = por %p88, %p89
      %p92 = scmp.ne.s32.totalorder %s75, %s91
      %p93 = scmp.eq.s32.totalorder %s27, 0
      %p94 = por %p92, %p93
      %s96 = sadd.s32 %s95, 1
      %p99 = scmp.eq.s32.totalorder %s21, 1
      %p100 = scmp.ne.s32.totalorder %s95, %s97
      %p101 = scmp.eq.s32.totalorder %s21, 0
      %p102 = por %p100, %p101
      %p103 = scmp.ne.s32.totalorder %s95, %s97
      %p104 = scmp.eq.s32.totalorder %s26, 1
      %p105 = por %p103, %p104
      %p106 = scmp.ne.s32.totalorder %s97, %s98
      %p107 = scmp.eq.s32.totalorder %s26, 0
      %p108 = por %p106, %p107
      %p109 = scmp.ne.s32.totalorder %s97, %s98
      %p110 = scmp.eq.s32.totalorder %s27, 1
      %p111 = por %p109, %p110
      %p113 = scmp.ne.s32.totalorder %s98, %s112
      %p114 = scmp.eq.s32.totalorder %s27, 0
      %p115 = por %p113, %p114
      %s117 = sadd.s32 %s116, 1
      %p120 = scmp.eq.s32.totalorder %s21, 1
      %p121 = scmp.ne.s32.totalorder %s116, %s118
      %p122 = scmp.eq.s32.totalorder %s21, 0
      %p123 = por %p121, %p122
      %p124 = scmp.ne.s32.totalorder %s116, %s118
      %p125 = scmp.eq.s32.totalorder %s26, 1
      %p126 = por %p124, %p125
      %p127 = scmp.ne.s32.totalorder %s118, %s119
      %p128 = scmp.eq.s32.totalorder %s26, 0
      %p129 = por %p127, %p128
      %p130 = scmp.ne.s32.totalorder %s118, %s119
      %p131 = scmp.eq.s32.totalorder %s27, 1
      %p132 = por %p130, %p131
      %p134 = scmp.ne.s32.totalorder %s119, %s133
      %p135 = scmp.eq.s32.totalorder %s27, 0
      %p136 = por %p134, %p135
      %s138 = sadd.s32 %s137, 1
      %p141 = scmp.eq.s32.totalorder %s21, 1
      %p142 = scmp.ne.s32.totalorder %s137, %s139
      %p143 = scmp.eq.s32.totalorder %s21, 0
      %p144 = por %p142, %p143
      %p145 = scmp.ne.s32.totalorder %s137, %s139
      %p146 = scmp.eq.s32.totalorder %s26, 1
      %p147 = por %p145, %p146
      %p148 = scmp.ne.s32.totalorder %s139, %s140
      %p149 = scmp.eq.s32.totalorder %s26, 0
      %p150 = por %p148, %p149
      %p151 = scmp.ne.s32.totalorder %s139, %s140
      %p152 = scmp.eq.s32.totalorder %s27, 1
      %p153 = por %p151, %p152
      %p155 = scmp.ne.s32.totalorder %s140, %s154
      %p156 = scmp.eq.s32.totalorder %s27, 0
      %p157 = por %p155, %p156
      %s158 = ssub.s32 %s28, %s40
      %p159 = scmp.eq.s32.totalorder %s158, 0
      %s161 = sadd.s32 %s160, 1
      %s162 = scalar_select %p159, %s160, %s161
      %p165 = pneg %p159
      %p166 = scmp.eq.s32.totalorder %s21, 1
      %p167 = por %p165, %p166
      %p168 = scmp.ne.s32.totalorder %s160, %s163
      %p169 = scmp.eq.s32.totalorder %s21, 0
      %p170 = por %p168, %p169
      %p171 = scmp.ne.s32.totalorder %s160, %s163
      %p172 = scmp.eq.s32.totalorder %s26, 1
      %p173 = por %p171, %p172
      %p174 = scmp.ne.s32.totalorder %s163, %s164
      %p175 = scmp.eq.s32.totalorder %s26, 0
      %p176 = por %p174, %p175
      %p177 = scmp.ne.s32.totalorder %s163, %s164
      %p178 = scmp.eq.s32.totalorder %s27, 1
      %p179 = por %p177, %p178
      %p181 = scmp.ne.s32.totalorder %s164, %s180
      %p182 = scmp.eq.s32.totalorder %s27, 0
      %p183 = por %p181, %p182
      %p184 = scmp.le.s32.totalorder 1, %s21
      %p185 = scmp.lt.s32.totalorder %s21, 3
      %p186 = pnand %p184, %p185
      %p187 = pneg %p186
      // Predicated region
      $region9: #{tpu_custom_call.1} parent=5 // pred_check
        _
      $region10: #{tpu_custom_call.1} parent=5 // pred_check_branch
        %189 = sbr.rel (%p186) target = $region12
      $region11: #{tpu_custom_call.1} parent=5 // pred_region
        %s190 = ssub.s32 %s21, 1
        // Predicated region
        $region13: #{tpu_custom_call.1} parent=11 // pred_check
          %p191 = pneg %p87
        $region14: #{tpu_custom_call.1} parent=11 // pred_check_branch
          %193 = sbr.rel (%p191) target = $region16
        $region15: #{tpu_custom_call.1} parent=11 // pred_region
          %s194 = smul.u32 128, %s31
          %s196 = ssub.s32 32768, 32768
          %197 = vsyncadd [#allocation8], %s196
          %s198 = smul.addr %s194, 2
          %s199 = smul.addr %s198, 128
          %s200 = scalar_lea.hbm %s1, %s199
          %s201 = sshll.u32 [#allocation7], 4
          %s202 = int_to_ptr.vmem [resolvable:$true] %s201
          %207 = dma.hbm_to_vmem [thread:$0]  %s200, 32768, %s202, [#allocation8], 256, 256, 16
        $region16: #{tpu_custom_call.1} parent=11 // pred_fallthru
          _
        // Predicated region
        $region17: #{tpu_custom_call.1} parent=11 // pred_check
          %p208 = pneg %p108
        $region18: #{tpu_custom_call.1} parent=11 // pred_check_branch
          %210 = sbr.rel (%p208) target = $region20
        $region19: #{tpu_custom_call.1} parent=11 // pred_region
          %s212 = ssub.s32 32, 32
          %213 = vsyncadd [#allocation8], %s212
          %s215 = sshll.u32 [#allocation9], 4
          %s216 = int_to_ptr.vmem [resolvable:$true] %s215
          %218 = dma.hbm_to_vmem [thread:$0]  %s2, 32, %s216, [#allocation8]
        $region20: #{tpu_custom_call.1} parent=11 // pred_fallthru
          _
        // Predicated region
        $region21: #{tpu_custom_call.1} parent=11 // pred_check
          %p219 = pneg %p129
        $region22: #{tpu_custom_call.1} parent=11 // pred_check_branch
          %221 = sbr.rel (%p219) target = $region24
        $region23: #{tpu_custom_call.1} parent=11 // pred_region
          %s223 = ssub.s32 32, 32
          %224 = vsyncadd [#allocation11], %s223
          %s226 = sshll.u32 [#allocation10], 4
          %s227 = int_to_ptr.vmem [resolvable:$true] %s226
          %229 = dma.hbm_to_vmem [thread:$0]  %s3, 32, %s227, [#allocation11]
        $region24: #{tpu_custom_call.1} parent=11 // pred_fallthru
          _
        // Predicated region
        $region25: #{tpu_custom_call.1} parent=11 // pred_check
          %p230 = pneg %p150
        $region26: #{tpu_custom_call.1} parent=11 // pred_check_branch
          %232 = sbr.rel (%p230) target = $region28
        $region27: #{tpu_custom_call.1} parent=11 // pred_region
          _
        $region28: #{tpu_custom_call.1} parent=11 // pred_fallthru
          _
      $region12: #{tpu_custom_call.1} parent=5 // pred_fallthru
        _
      %p233 = scmp.lt.s32.totalorder %s21, 2
      // Predicated region
      $region29: #{tpu_custom_call.1} parent=5 // pred_check
        %p234 = pneg %p233
      $region30: #{tpu_custom_call.1} parent=5 // pred_check_branch
        %236 = sbr.rel (%p234) target = $region32
      $region31: #{tpu_custom_call.1} parent=5 // pred_region
        // Predicated region
        $region33: #{tpu_custom_call.1} parent=31 // pred_check
          %p237 = pneg %p55
        $region34: #{tpu_custom_call.1} parent=31 // pred_check_branch
          %239 = sbr.rel (%p237) target = $region36
        $region35: #{tpu_custom_call.1} parent=31 // pred_region
          %s240 = sand.u32 %s45, 1
          %s241 = scalar_lea.sflag [#allocation5], %s240
          %s242 = sand.u32 %s45, 1
          %s243 = smul.addr %s242, 2048
          %s244 = scalar_lea.vmem [#allocation4], %s243
          %s245 = smul.u32 32, %s28
          %s246 = smul.u32 8, %s29
          %s247 = ssub.s32 38, %s245
          %p248 = scmp.lt.s32.totalorder %s247, 32
          %s249 = scalar_select %p248, %s247, 32
          %s250 = smul.u32 128, %s249
          %s251 = smul.u32 %s250, 8
          %s253 = ssub.s32 32768, %s251
          %254 = vsyncadd %s241, %s253
          %p255 = scmp.ne.s32.totalorder 0, %s251
          %s256 = smul.addr %s245, 8
          %s257 = sadd.s32 %s246, %s256
          %s258 = smul.addr %s257, 128
          %s259 = scalar_lea.hbm %s0, %s258
          %s260 = smul.u32 64, %s249
          %s261 = sshll.u32 %s244, 4
          %s262 = int_to_ptr.vmem [resolvable:$true] %s261
          %s263 = sshll.u32 %s260, 4
          %267 = dma.hbm_to_vmem [thread:$0]  (%p255), %s259, %s263, %s262, %s241, 1024, 1024, 64
        $region36: #{tpu_custom_call.1} parent=31 // pred_fallthru
          _
      $region32: #{tpu_custom_call.1} parent=5 // pred_fallthru
        _
      %p268 = scmp.le.s32.totalorder 1, %s21
      %p269 = scmp.lt.s32.totalorder %s21, 3
      %p270 = pnand %p268, %p269
      %p271 = pneg %p270
      // Predicated region
      $region37: #{tpu_custom_call.1} parent=5 // pred_check
        _
      $region38: #{tpu_custom_call.1} parent=5 // pred_check_branch
        %273 = sbr.rel (%p270) target = $region40
      $region39: #{tpu_custom_call.1} parent=5 // pred_region
        %s274 = ssub.s32 %s21, 1
        %s275 = sand.u32 %s48, 1
        %s276 = scalar_lea.sflag [#allocation5], %s275
        %s277 = sand.u32 %s48, 1
        %s278 = smul.addr %s277, 2048
        %s279 = scalar_lea.vmem [#allocation4], %s278
        // Predicated region
        $region41: #{tpu_custom_call.1} parent=39 // pred_check
          %p280 = pneg %p61
        $region42: #{tpu_custom_call.1} parent=39 // pred_check_branch
          %282 = sbr.rel (%p280) target = $region44
        $region43: #{tpu_custom_call.1} parent=39 // pred_region
          %283 = dma.done %s276, 32768
        $region44: #{tpu_custom_call.1} parent=39 // pred_fallthru
          _
        // Predicated region
        $region45: #{tpu_custom_call.1} parent=39 // pred_check
          %p284 = pneg %p87
        $region46: #{tpu_custom_call.1} parent=39 // pred_check_branch
          %286 = sbr.rel (%p284) target = $region48
        $region47: #{tpu_custom_call.1} parent=39 // pred_region
          %287 = dma.done [#allocation8], 32768
        $region48: #{tpu_custom_call.1} parent=39 // pred_fallthru
          _
        // Predicated region
        $region49: #{tpu_custom_call.1} parent=39 // pred_check
          %p288 = pneg %p108
        $region50: #{tpu_custom_call.1} parent=39 // pred_check_branch
          %290 = sbr.rel (%p288) target = $region52
        $region51: #{tpu_custom_call.1} parent=39 // pred_region
          %291 = dma.done [#allocation8], 32
        $region52: #{tpu_custom_call.1} parent=39 // pred_fallthru
          _
        // Predicated region
        $region53: #{tpu_custom_call.1} parent=39 // pred_check
          %p292 = pneg %p129
        $region54: #{tpu_custom_call.1} parent=39 // pred_check_branch
          %294 = sbr.rel (%p292) target = $region56
        $region55: #{tpu_custom_call.1} parent=39 // pred_region
          %295 = dma.done [#allocation11], 32
        $region56: #{tpu_custom_call.1} parent=39 // pred_fallthru
          _
        %s296 = sand.u32 %s48, 1
        %s297 = scalar_lea.sflag [#allocation5], %s296
        %s298 = sand.u32 %s48, 1
        %s299 = smul.addr %s298, 2048
        %s300 = scalar_lea.vmem [#allocation4], %s299
        %p301 = pneg %p61
        %p302 = pneg %p58
        %p303 = pneg %p87
        %p304 = pneg %p84
        %p305 = pneg %p108
        %p306 = pneg %p105
        %p307 = pneg %p129
        %p308 = pneg %p126
        %p309 = pneg %p150
        %p310 = pneg %p147
        %p311 = pneg %p176
        %p312 = pneg %p173
        %s313 = sand.u32 %s163, 1
        %s314 = scalar_lea.sflag [#allocation6], %s313
        %s315 = sand.u32 %s163, 1
        %s316 = smul.addr %s315, 2
        %s317 = scalar_lea.vmem [#allocation12], %s316
        %s318 = smul.u32 32, %s30
        %s319 = smul.u32 8, %s31
        %s320 = ssub.s32 38, %s318
        %p321 = scmp.lt.s32.totalorder %s320, 32
        %s322 = scalar_select %p321, %s320, 32
        %s323 = smul.u32 128, %s322
        %s324 = smul.u32 %s323, 8
        %s325 = smul.u32 128, %s31
        %s326 = smul.u32 2, %s30
        %s327 = ssub.s32 3, %s326
        %p328 = scmp.lt.s32.totalorder %s327, 2
        %s329 = scalar_select %p328, %s327, 2
        %s330 = smul.u32 16, %s329
        %p331 = scmp.eq.s32.totalorder %s31, 0
        // Predicated region
        $region57: #{tpu_custom_call.1} parent=39 // pred_check
          %p332 = pneg %p331
        $region58: #{tpu_custom_call.1} parent=39 // pred_check_branch
          %334 = sbr.rel (%p332) target = $region60
        $region59: #{tpu_custom_call.1} parent=39 // pred_region
          %335 = vst [vmem:[#allocation2] sm:$0xff] 0.0
          %336 = vst [vmem:[#allocation2 + $0x8] sm:$0xff] 0.0
          %337 = vst [vmem:[#allocation2 + $0x10] sm:$0xff] 0.0
          %338 = vst [vmem:[#allocation2 + $0x18] sm:$0xff] 0.0
          %339 = vst [vmem:[#allocation2 + $0x20] sm:$0xff] 0.0
          %340 = vst [vmem:[#allocation2 + $0x28] sm:$0xff] 0.0
          %341 = vst [vmem:[#allocation2 + $0x30] sm:$0xff] 0.0
          %342 = vst [vmem:[#allocation2 + $0x38] sm:$0xff] 0.0
          %343 = vst [vmem:[#allocation2 + $0x40] sm:$0xff] 0.0
          %344 = vst [vmem:[#allocation2 + $0x48] sm:$0xff] 0.0
          %345 = vst [vmem:[#allocation2 + $0x50] sm:$0xff] 0.0
          %346 = vst [vmem:[#allocation2 + $0x58] sm:$0xff] 0.0
          %347 = vst [vmem:[#allocation2 + $0x60] sm:$0xff] 0.0
          %348 = vst [vmem:[#allocation2 + $0x68] sm:$0xff] 0.0
          %349 = vst [vmem:[#allocation2 + $0x70] sm:$0xff] 0.0
          %350 = vst [vmem:[#allocation2 + $0x78] sm:$0xff] 0.0
          %351 = vst [vmem:[#allocation2 + $0x80] sm:$0xff] 0.0
          %352 = vst [vmem:[#allocation2 + $0x88] sm:$0xff] 0.0
          %353 = vst [vmem:[#allocation2 + $0x90] sm:$0xff] 0.0
          %354 = vst [vmem:[#allocation2 + $0x98] sm:$0xff] 0.0
          %355 = vst [vmem:[#allocation2 + $0xa0] sm:$0xff] 0.0
          %356 = vst [vmem:[#allocation2 + $0xa8] sm:$0xff] 0.0
          %357 = vst [vmem:[#allocation2 + $0xb0] sm:$0xff] 0.0
          %358 = vst [vmem:[#allocation2 + $0xb8] sm:$0xff] 0.0
          %359 = vst [vmem:[#allocation2 + $0xc0] sm:$0xff] 0.0
          %360 = vst [vmem:[#allocation2 + $0xc8] sm:$0xff] 0.0
          %361 = vst [vmem:[#allocation2 + $0xd0] sm:$0xff] 0.0
          %362 = vst [vmem:[#allocation2 + $0xd8] sm:$0xff] 0.0
          %363 = vst [vmem:[#allocation2 + $0xe0] sm:$0xff] 0.0
          %364 = vst [vmem:[#allocation2 + $0xe8] sm:$0xff] 0.0
          %365 = vst [vmem:[#allocation2 + $0xf0] sm:$0xff] 0.0
          %366 = vst [vmem:[#allocation2 + $0xf8] sm:$0xff] 0.0
          %367 = vst [vmem:[#allocation2 + $0x100] sm:$0xff] 0.0
          %368 = vst [vmem:[#allocation2 + $0x108] sm:$0xff] 0.0
          %369 = vst [vmem:[#allocation2 + $0x110] sm:$0xff] 0.0
          %370 = vst [vmem:[#allocation2 + $0x118] sm:$0xff] 0.0
          %371 = vst [vmem:[#allocation2 + $0x120] sm:$0xff] 0.0
          %372 = vst [vmem:[#allocation2 + $0x128] sm:$0xff] 0.0
          %373 = vst [vmem:[#allocation2 + $0x130] sm:$0xff] 0.0
          %374 = vst [vmem:[#allocation2 + $0x138] sm:$0xff] 0.0
          %375 = vst [vmem:[#allocation2 + $0x140] sm:$0xff] 0.0
          %376 = vst [vmem:[#allocation2 + $0x148] sm:$0xff] 0.0
          %377 = vst [vmem:[#allocation2 + $0x150] sm:$0xff] 0.0
          %378 = vst [vmem:[#allocation2 + $0x158] sm:$0xff] 0.0
          %379 = vst [vmem:[#allocation2 + $0x160] sm:$0xff] 0.0
          %380 = vst [vmem:[#allocation2 + $0x168] sm:$0xff] 0.0
          %381 = vst [vmem:[#allocation2 + $0x170] sm:$0xff] 0.0
          %382 = vst [vmem:[#allocation2 + $0x178] sm:$0xff] 0.0
          %383 = vst [vmem:[#allocation2 + $0x180] sm:$0xff] 0.0
          %384 = vst [vmem:[#allocation2 + $0x188] sm:$0xff] 0.0
          %385 = vst [vmem:[#allocation2 + $0x190] sm:$0xff] 0.0
          %386 = vst [vmem:[#allocation2 + $0x198] sm:$0xff] 0.0
          %387 = vst [vmem:[#allocation2 + $0x1a0] sm:$0xff] 0.0
          %388 = vst [vmem:[#allocation2 + $0x1a8] sm:$0xff] 0.0
          %389 = vst [vmem:[#allocation2 + $0x1b0] sm:$0xff] 0.0
          %390 = vst [vmem:[#allocation2 + $0x1b8] sm:$0xff] 0.0
          %391 = vst [vmem:[#allocation2 + $0x1c0] sm:$0xff] 0.0
          %392 = vst [vmem:[#allocation2 + $0x1c8] sm:$0xff] 0.0
          %393 = vst [vmem:[#allocation2 + $0x1d0] sm:$0xff] 0.0
          %394 = vst [vmem:[#allocation2 + $0x1d8] sm:$0xff] 0.0
          %395 = vst [vmem:[#allocation2 + $0x1e0] sm:$0xff] 0.0
          %396 = vst [vmem:[#allocation2 + $0x1e8] sm:$0xff] 0.0
          %397 = vst [vmem:[#allocation2 + $0x1f0] sm:$0xff] 0.0
          %398 = vst [vmem:[#allocation2 + $0x1f8] sm:$0xff] 0.0
        $region60: #{tpu_custom_call.1} parent=39 // pred_fallthru
          _
        %v399 = vld [vmem:[#allocation2] sm:$0xff]
        %v400 = vld [vmem:[#allocation2 + $0x8] sm:$0xff]
        %v401 = vld [vmem:[#allocation2 + $0x10] sm:$0xff]
        %v402 = vld [vmem:[#allocation2 + $0x18] sm:$0xff]
        %v403 = vld [vmem:[#allocation2 + $0x20] sm:$0xff]
        %v404 = vld [vmem:[#allocation2 + $0x28] sm:$0xff]
        %v405 = vld [vmem:[#allocation2 + $0x30] sm:$0xff]
        %v406 = vld [vmem:[#allocation2 + $0x38] sm:$0xff]
        %v407 = vld [vmem:[#allocation2 + $0x40] sm:$0xff]
        %v408 = vld [vmem:[#allocation2 + $0x48] sm:$0xff]
        %v409 = vld [vmem:[#allocation2 + $0x50] sm:$0xff]
        %v410 = vld [vmem:[#allocation2 + $0x58] sm:$0xff]
        %v411 = vld [vmem:[#allocation2 + $0x60] sm:$0xff]
        %v412 = vld [vmem:[#allocation2 + $0x68] sm:$0xff]
        %v413 = vld [vmem:[#allocation2 + $0x70] sm:$0xff]
        %v414 = vld [vmem:[#allocation2 + $0x78] sm:$0xff]
        %v415 = vld [vmem:[#allocation2 + $0x80] sm:$0xff]
        %v416 = vld [vmem:[#allocation2 + $0x88] sm:$0xff]
        %v417 = vld [vmem:[#allocation2 + $0x90] sm:$0xff]
        %v418 = vld [vmem:[#allocation2 + $0x98] sm:$0xff]
        %v419 = vld [vmem:[#allocation2 + $0xa0] sm:$0xff]
        %v420 = vld [vmem:[#allocation2 + $0xa8] sm:$0xff]
        %v421 = vld [vmem:[#allocation2 + $0xb0] sm:$0xff]
        %v422 = vld [vmem:[#allocation2 + $0xb8] sm:$0xff]
        %v423 = vld [vmem:[#allocation2 + $0xc0] sm:$0xff]
        %v424 = vld [vmem:[#allocation2 + $0xc8] sm:$0xff]
        %v425 = vld [vmem:[#allocation2 + $0xd0] sm:$0xff]
        %v426 = vld [vmem:[#allocation2 + $0xd8] sm:$0xff]
        %v427 = vld [vmem:[#allocation2 + $0xe0] sm:$0xff]
        %v428 = vld [vmem:[#allocation2 + $0xe8] sm:$0xff]
        %v429 = vld [vmem:[#allocation2 + $0xf0] sm:$0xff]
        %v430 = vld [vmem:[#allocation2 + $0xf8] sm:$0xff]
        %v431 = vld [vmem:[#allocation2 + $0x100] sm:$0xff]
        %v432 = vld [vmem:[#allocation2 + $0x108] sm:$0xff]
        %v433 = vld [vmem:[#allocation2 + $0x110] sm:$0xff]
        %v434 = vld [vmem:[#allocation2 + $0x118] sm:$0xff]
        %v435 = vld [vmem:[#allocation2 + $0x120] sm:$0xff]
        %v436 = vld [vmem:[#allocation2 + $0x128] sm:$0xff]
        %v437 = vld [vmem:[#allocation2 + $0x130] sm:$0xff]
        %v438 = vld [vmem:[#allocation2 + $0x138] sm:$0xff]
        %v439 = vld [vmem:[#allocation2 + $0x140] sm:$0xff]
        %v440 = vld [vmem:[#allocation2 + $0x148] sm:$0xff]
        %v441 = vld [vmem:[#allocation2 + $0x150] sm:$0xff]
        %v442 = vld [vmem:[#allocation2 + $0x158] sm:$0xff]
        %v443 = vld [vmem:[#allocation2 + $0x160] sm:$0xff]
        %v444 = vld [vmem:[#allocation2 + $0x168] sm:$0xff]
        %v445 = vld [vmem:[#allocation2 + $0x170] sm:$0xff]
        %v446 = vld [vmem:[#allocation2 + $0x178] sm:$0xff]
        %v447 = vld [vmem:[#allocation2 + $0x180] sm:$0xff]
        %v448 = vld [vmem:[#allocation2 + $0x188] sm:$0xff]
        %v449 = vld [vmem:[#allocation2 + $0x190] sm:$0xff]
        %v450 = vld [vmem:[#allocation2 + $0x198] sm:$0xff]
        %v451 = vld [vmem:[#allocation2 + $0x1a0] sm:$0xff]
        %v452 = vld [vmem:[#allocation2 + $0x1a8] sm:$0xff]
        %v453 = vld [vmem:[#allocation2 + $0x1b0] sm:$0xff]
        %v454 = vld [vmem:[#allocation2 + $0x1b8] sm:$0xff]
        %v455 = vld [vmem:[#allocation2 + $0x1c0] sm:$0xff]
        %v456 = vld [vmem:[#allocation2 + $0x1c8] sm:$0xff]
        %v457 = vld [vmem:[#allocation2 + $0x1d0] sm:$0xff]
        %v458 = vld [vmem:[#allocation2 + $0x1d8] sm:$0xff]
        %v459 = vld [vmem:[#allocation2 + $0x1e0] sm:$0xff]
        %v460 = vld [vmem:[#allocation2 + $0x1e8] sm:$0xff]
        %v461 = vld [vmem:[#allocation2 + $0x1f0] sm:$0xff]
        %v462 = vld [vmem:[#allocation2 + $0x1f8] sm:$0xff]
        %v463 = vld [vmem:[%s279] sm:$0xff]
        %v464 = vld [vmem:[%s279 + $0x8] sm:$0xff]
        %v465 = vld [vmem:[%s279 + $0x10] sm:$0xff]
        %v466 = vld [vmem:[%s279 + $0x18] sm:$0xff]
        %v467 = vld [vmem:[%s279 + $0x20] sm:$0xff]
        %v468 = vld [vmem:[%s279 + $0x28] sm:$0xff]
        %v469 = vld [vmem:[%s279 + $0x30] sm:$0xff]
        %v470 = vld [vmem:[%s279 + $0x38] sm:$0xff]
        %v471 = vld [vmem:[%s279 + $0x40] sm:$0xff]
        %v472 = vld [vmem:[%s279 + $0x48] sm:$0xff]
        %v473 = vld [vmem:[%s279 + $0x50] sm:$0xff]
        %v474 = vld [vmem:[%s279 + $0x58] sm:$0xff]
        %v475 = vld [vmem:[%s279 + $0x60] sm:$0xff]
        %v476 = vld [vmem:[%s279 + $0x68] sm:$0xff]
        %v477 = vld [vmem:[%s279 + $0x70] sm:$0xff]
        %v478 = vld [vmem:[%s279 + $0x78] sm:$0xff]
        %v479 = vld [vmem:[%s279 + $0x80] sm:$0xff]
        %v480 = vld [vmem:[%s279 + $0x88] sm:$0xff]
        %v481 = vld [vmem:[%s279 + $0x90] sm:$0xff]
        %v482 = vld [vmem:[%s279 + $0x98] sm:$0xff]
        %v483 = vld [vmem:[%s279 + $0xa0] sm:$0xff]
        %v484 = vld [vmem:[%s279 + $0xa8] sm:$0xff]
        %v485 = vld [vmem:[%s279 + $0xb0] sm:$0xff]
        %v486 = vld [vmem:[%s279 + $0xb8] sm:$0xff]
        %v487 = vld [vmem:[%s279 + $0xc0] sm:$0xff]
        %v488 = vld [vmem:[%s279 + $0xc8] sm:$0xff]
        %v489 = vld [vmem:[%s279 + $0xd0] sm:$0xff]
        %v490 = vld [vmem:[%s279 + $0xd8] sm:$0xff]
        %v491 = vld [vmem:[%s279 + $0xe0] sm:$0xff]
        %v492 = vld [vmem:[%s279 + $0xe8] sm:$0xff]
        %v493 = vld [vmem:[%s279 + $0xf0] sm:$0xff]
        %v494 = vld [vmem:[%s279 + $0xf8] sm:$0xff]
        %v495 = vld [vmem:[%s279 + $0x100] sm:$0xff]
        %v496 = vld [vmem:[%s279 + $0x108] sm:$0xff]
        %v497 = vld [vmem:[%s279 + $0x110] sm:$0xff]
        %v498 = vld [vmem:[%s279 + $0x118] sm:$0xff]
        %v499 = vld [vmem:[%s279 + $0x120] sm:$0xff]
        %v500 = vld [vmem:[%s279 + $0x128] sm:$0xff]
        %v501 = vld [vmem:[%s279 + $0x130] sm:$0xff]
        %v502 = vld [vmem:[%s279 + $0x138] sm:$0xff]
        %v503 = vld [vmem:[%s279 + $0x140] sm:$0xff]
        %v504 = vld [vmem:[%s279 + $0x148] sm:$0xff]
        %v505 = vld [vmem:[%s279 + $0x150] sm:$0xff]
        %v506 = vld [vmem:[%s279 + $0x158] sm:$0xff]
        %v507 = vld [vmem:[%s279 + $0x160] sm:$0xff]
        %v508 = vld [vmem:[%s279 + $0x168] sm:$0xff]
        %v509 = vld [vmem:[%s279 + $0x170] sm:$0xff]
        %v510 = vld [vmem:[%s279 + $0x178] sm:$0xff]
        %v511 = vld [vmem:[%s279 + $0x180] sm:$0xff]
        %v512 = vld [vmem:[%s279 + $0x188] sm:$0xff]
        %v513 = vld [vmem:[%s279 + $0x190] sm:$0xff]
        %v514 = vld [vmem:[%s279 + $0x198] sm:$0xff]
        %v515 = vld [vmem:[%s279 + $0x1a0] sm:$0xff]
        %v516 = vld [vmem:[%s279 + $0x1a8] sm:$0xff]
        %v517 = vld [vmem:[%s279 + $0x1b0] sm:$0xff]
        %v518 = vld [vmem:[%s279 + $0x1b8] sm:$0xff]
        %v519 = vld [vmem:[%s279 + $0x1c0] sm:$0xff]
        %v520 = vld [vmem:[%s279 + $0x1c8] sm:$0xff]
        %v521 = vld [vmem:[%s279 + $0x1d0] sm:$0xff]
        %v522 = vld [vmem:[%s279 + $0x1d8] sm:$0xff]
        %v523 = vld [vmem:[%s279 + $0x1e0] sm:$0xff]
        %v524 = vld [vmem:[%s279 + $0x1e8] sm:$0xff]
        %v525 = vld [vmem:[%s279 + $0x1f0] sm:$0xff]
        %v526 = vld [vmem:[%s279 + $0x1f8] sm:$0xff]
        %v527 = vld [vmem:[%s279 + $0x200] sm:$0xff]
        %v528 = vld [vmem:[%s279 + $0x208] sm:$0xff]
        %v529 = vld [vmem:[%s279 + $0x210] sm:$0xff]
        %v530 = vld [vmem:[%s279 + $0x218] sm:$0xff]
        %v531 = vld [vmem:[%s279 + $0x220] sm:$0xff]
        %v532 = vld [vmem:[%s279 + $0x228] sm:$0xff]
        %v533 = vld [vmem:[%s279 + $0x230] sm:$0xff]
        %v534 = vld [vmem:[%s279 + $0x238] sm:$0xff]
        %v535 = vld [vmem:[%s279 + $0x240] sm:$0xff]
        %v536 = vld [vmem:[%s279 + $0x248] sm:$0xff]
        %v537 = vld [vmem:[%s279 + $0x250] sm:$0xff]
        %v538 = vld [vmem:[%s279 + $0x258] sm:$0xff]
        %v539 = vld [vmem:[%s279 + $0x260] sm:$0xff]
        %v540 = vld [vmem:[%s279 + $0x268] sm:$0xff]
        %v541 = vld [vmem:[%s279 + $0x270] sm:$0xff]
        %v542 = vld [vmem:[%s279 + $0x278] sm:$0xff]
        %v543 = vld [vmem:[%s279 + $0x280] sm:$0xff]
        %v544 = vld [vmem:[%s279 + $0x288] sm:$0xff]
        %v545 = vld [vmem:[%s279 + $0x290] sm:$0xff]
        %v546 = vld [vmem:[%s279 + $0x298] sm:$0xff]
        %v547 = vld [vmem:[%s279 + $0x2a0] sm:$0xff]
        %v548 = vld [vmem:[%s279 + $0x2a8] sm:$0xff]
        %v549 = vld [vmem:[%s279 + $0x2b0] sm:$0xff]
        %v550 = vld [vmem:[%s279 + $0x2b8] sm:$0xff]
        %v551 = vld [vmem:[%s279 + $0x2c0] sm:$0xff]
        %v552 = vld [vmem:[%s279 + $0x2c8] sm:$0xff]
        %v553 = vld [vmem:[%s279 + $0x2d0] sm:$0xff]
        %v554 = vld [vmem:[%s279 + $0x2d8] sm:$0xff]
        %v555 = vld [vmem:[%s279 + $0x2e0] sm:$0xff]
        %v556 = vld [vmem:[%s279 + $0x2e8] sm:$0xff]
        %v557 = vld [vmem:[%s279 + $0x2f0] sm:$0xff]
        %v558 = vld [vmem:[%s279 + $0x2f8] sm:$0xff]
        %v559 = vld [vmem:[%s279 + $0x300] sm:$0xff]
        %v560 = vld [vmem:[%s279 + $0x308] sm:$0xff]
        %v561 = vld [vmem:[%s279 + $0x310] sm:$0xff]
        %v562 = vld [vmem:[%s279 + $0x318] sm:$0xff]
        %v563 = vld [vmem:[%s279 + $0x320] sm:$0xff]
        %v564 = vld [vmem:[%s279 + $0x328] sm:$0xff]
        %v565 = vld [vmem:[%s279 + $0x330] sm:$0xff]
        %v566 = vld [vmem:[%s279 + $0x338] sm:$0xff]
        %v567 = vld [vmem:[%s279 + $0x340] sm:$0xff]
        %v568 = vld [vmem:[%s279 + $0x348] sm:$0xff]
        %v569 = vld [vmem:[%s279 + $0x350] sm:$0xff]
        %v570 = vld [vmem:[%s279 + $0x358] sm:$0xff]
        %v571 = vld [vmem:[%s279 + $0x360] sm:$0xff]
        %v572 = vld [vmem:[%s279 + $0x368] sm:$0xff]
        %v573 = vld [vmem:[%s279 + $0x370] sm:$0xff]
        %v574 = vld [vmem:[%s279 + $0x378] sm:$0xff]
        %v575 = vld [vmem:[%s279 + $0x380] sm:$0xff]
        %v576 = vld [vmem:[%s279 + $0x388] sm:$0xff]
        %v577 = vld [vmem:[%s279 + $0x390] sm:$0xff]
        %v578 = vld [vmem:[%s279 + $0x398] sm:$0xff]
        %v579 = vld [vmem:[%s279 + $0x3a0] sm:$0xff]
        %v580 = vld [vmem:[%s279 + $0x3a8] sm:$0xff]
        %v581 = vld [vmem:[%s279 + $0x3b0] sm:$0xff]
        %v582 = vld [vmem:[%s279 + $0x3b8] sm:$0xff]
        %v583 = vld [vmem:[%s279 + $0x3c0] sm:$0xff]
        %v584 = vld [vmem:[%s279 + $0x3c8] sm:$0xff]
        %v585 = vld [vmem:[%s279 + $0x3d0] sm:$0xff]
        %v586 = vld [vmem:[%s279 + $0x3d8] sm:$0xff]
        %v587 = vld [vmem:[%s279 + $0x3e0] sm:$0xff]
        %v588 = vld [vmem:[%s279 + $0x3e8] sm:$0xff]
        %v589 = vld [vmem:[%s279 + $0x3f0] sm:$0xff]
        %v590 = vld [vmem:[%s279 + $0x3f8] sm:$0xff]
        %v591 = vld [vmem:[%s279 + $0x400] sm:$0xff]
        %v592 = vld [vmem:[%s279 + $0x408] sm:$0xff]
        %v593 = vld [vmem:[%s279 + $0x410] sm:$0xff]
        %v594 = vld [vmem:[%s279 + $0x418] sm:$0xff]
        %v595 = vld [vmem:[%s279 + $0x420] sm:$0xff]
        %v596 = vld [vmem:[%s279 + $0x428] sm:$0xff]
        %v597 = vld [vmem:[%s279 + $0x430] sm:$0xff]
        %v598 = vld [vmem:[%s279 + $0x438] sm:$0xff]
        %v599 = vld [vmem:[%s279 + $0x440] sm:$0xff]
        %v600 = vld [vmem:[%s279 + $0x448] sm:$0xff]
        %v601 = vld [vmem:[%s279 + $0x450] sm:$0xff]
        %v602 = vld [vmem:[%s279 + $0x458] sm:$0xff]
        %v603 = vld [vmem:[%s279 + $0x460] sm:$0xff]
        %v604 = vld [vmem:[%s279 + $0x468] sm:$0xff]
        %v605 = vld [vmem:[%s279 + $0x470] sm:$0xff]
        %v606 = vld [vmem:[%s279 + $0x478] sm:$0xff]
        %v607 = vld [vmem:[%s279 + $0x480] sm:$0xff]
        %v608 = vld [vmem:[%s279 + $0x488] sm:$0xff]
        %v609 = vld [vmem:[%s279 + $0x490] sm:$0xff]
        %v610 = vld [vmem:[%s279 + $0x498] sm:$0xff]
        %v611 = vld [vmem:[%s279 + $0x4a0] sm:$0xff]
        %v612 = vld [vmem:[%s279 + $0x4a8] sm:$0xff]
        %v613 = vld [vmem:[%s279 + $0x4b0] sm:$0xff]
        %v614 = vld [vmem:[%s279 + $0x4b8] sm:$0xff]
        %v615 = vld [vmem:[%s279 + $0x4c0] sm:$0xff]
        %v616 = vld [vmem:[%s279 + $0x4c8] sm:$0xff]
        %v617 = vld [vmem:[%s279 + $0x4d0] sm:$0xff]
        %v618 = vld [vmem:[%s279 + $0x4d8] sm:$0xff]
        %v619 = vld [vmem:[%s279 + $0x4e0] sm:$0xff]
        %v620 = vld [vmem:[%s279 + $0x4e8] sm:$0xff]
        %v621 = vld [vmem:[%s279 + $0x4f0] sm:$0xff]
        %v622 = vld [vmem:[%s279 + $0x4f8] sm:$0xff]
        %v623 = vld [vmem:[%s279 + $0x500] sm:$0xff]
        %v624 = vld [vmem:[%s279 + $0x508] sm:$0xff]
        %v625 = vld [vmem:[%s279 + $0x510] sm:$0xff]
        %v626 = vld [vmem:[%s279 + $0x518] sm:$0xff]
        %v627 = vld [vmem:[%s279 + $0x520] sm:$0xff]
        %v628 = vld [vmem:[%s279 + $0x528] sm:$0xff]
        %v629 = vld [vmem:[%s279 + $0x530] sm:$0xff]
        %v630 = vld [vmem:[%s279 + $0x538] sm:$0xff]
        %v631 = vld [vmem:[%s279 + $0x540] sm:$0xff]
        %v632 = vld [vmem:[%s279 + $0x548] sm:$0xff]
        %v633 = vld [vmem:[%s279 + $0x550] sm:$0xff]
        %v634 = vld [vmem:[%s279 + $0x558] sm:$0xff]
        %v635 = vld [vmem:[%s279 + $0x560] sm:$0xff]
        %v636 = vld [vmem:[%s279 + $0x568] sm:$0xff]
        %v637 = vld [vmem:[%s279 + $0x570] sm:$0xff]
        %v638 = vld [vmem:[%s279 + $0x578] sm:$0xff]
        %v639 = vld [vmem:[%s279 + $0x580] sm:$0xff]
        %v640 = vld [vmem:[%s279 + $0x588] sm:$0xff]
        %v641 = vld [vmem:[%s279 + $0x590] sm:$0xff]
        %v642 = vld [vmem:[%s279 + $0x598] sm:$0xff]
        %v643 = vld [vmem:[%s279 + $0x5a0] sm:$0xff]
        %v644 = vld [vmem:[%s279 + $0x5a8] sm:$0xff]
        %v645 = vld [vmem:[%s279 + $0x5b0] sm:$0xff]
        %v646 = vld [vmem:[%s279 + $0x5b8] sm:$0xff]
        %v647 = vld [vmem:[%s279 + $0x5c0] sm:$0xff]
        %v648 = vld [vmem:[%s279 + $0x5c8] sm:$0xff]
        %v649 = vld [vmem:[%s279 + $0x5d0] sm:$0xff]
        %v650 = vld [vmem:[%s279 + $0x5d8] sm:$0xff]
        %v651 = vld [vmem:[%s279 + $0x5e0] sm:$0xff]
        %v652 = vld [vmem:[%s279 + $0x5e8] sm:$0xff]
        %v653 = vld [vmem:[%s279 + $0x5f0] sm:$0xff]
        %v654 = vld [vmem:[%s279 + $0x5f8] sm:$0xff]
        %v655 = vld [vmem:[%s279 + $0x600] sm:$0xff]
        %v656 = vld [vmem:[%s279 + $0x608] sm:$0xff]
        %v657 = vld [vmem:[%s279 + $0x610] sm:$0xff]
        %v658 = vld [vmem:[%s279 + $0x618] sm:$0xff]
        %v659 = vld [vmem:[%s279 + $0x620] sm:$0xff]
        %v660 = vld [vmem:[%s279 + $0x628] sm:$0xff]
        %v661 = vld [vmem:[%s279 + $0x630] sm:$0xff]
        %v662 = vld [vmem:[%s279 + $0x638] sm:$0xff]
        %v663 = vld [vmem:[%s279 + $0x640] sm:$0xff]
        %v664 = vld [vmem:[%s279 + $0x648] sm:$0xff]
        %v665 = vld [vmem:[%s279 + $0x650] sm:$0xff]
        %v666 = vld [vmem:[%s279 + $0x658] sm:$0xff]
        %v667 = vld [vmem:[%s279 + $0x660] sm:$0xff]
        %v668 = vld [vmem:[%s279 + $0x668] sm:$0xff]
        %v669 = vld [vmem:[%s279 + $0x670] sm:$0xff]
        %v670 = vld [vmem:[%s279 + $0x678] sm:$0xff]
        %v671 = vld [vmem:[%s279 + $0x680] sm:$0xff]
        %v672 = vld [vmem:[%s279 + $0x688] sm:$0xff]
        %v673 = vld [vmem:[%s279 + $0x690] sm:$0xff]
        %v674 = vld [vmem:[%s279 + $0x698] sm:$0xff]
        %v675 = vld [vmem:[%s279 + $0x6a0] sm:$0xff]
        %v676 = vld [vmem:[%s279 + $0x6a8] sm:$0xff]
        %v677 = vld [vmem:[%s279 + $0x6b0] sm:$0xff]
        %v678 = vld [vmem:[%s279 + $0x6b8] sm:$0xff]
        %v679 = vld [vmem:[%s279 + $0x6c0] sm:$0xff]
        %v680 = vld [vmem:[%s279 + $0x6c8] sm:$0xff]
        %v681 = vld [vmem:[%s279 + $0x6d0] sm:$0xff]
        %v682 = vld [vmem:[%s279 + $0x6d8] sm:$0xff]
        %v683 = vld [vmem:[%s279 + $0x6e0] sm:$0xff]
        %v684 = vld [vmem:[%s279 + $0x6e8] sm:$0xff]
        %v685 = vld [vmem:[%s279 + $0x6f0] sm:$0xff]
        %v686 = vld [vmem:[%s279 + $0x6f8] sm:$0xff]
        %v687 = vld [vmem:[%s279 + $0x700] sm:$0xff]
        %v688 = vld [vmem:[%s279 + $0x708] sm:$0xff]
        %v689 = vld [vmem:[%s279 + $0x710] sm:$0xff]
        %v690 = vld [vmem:[%s279 + $0x718] sm:$0xff]
        %v691 = vld [vmem:[%s279 + $0x720] sm:$0xff]
        %v692 = vld [vmem:[%s279 + $0x728] sm:$0xff]
        %v693 = vld [vmem:[%s279 + $0x730] sm:$0xff]
        %v694 = vld [vmem:[%s279 + $0x738] sm:$0xff]
        %v695 = vld [vmem:[%s279 + $0x740] sm:$0xff]
        %v696 = vld [vmem:[%s279 + $0x748] sm:$0xff]
        %v697 = vld [vmem:[%s279 + $0x750] sm:$0xff]
        %v698 = vld [vmem:[%s279 + $0x758] sm:$0xff]
        %v699 = vld [vmem:[%s279 + $0x760] sm:$0xff]
        %v700 = vld [vmem:[%s279 + $0x768] sm:$0xff]
        %v701 = vld [vmem:[%s279 + $0x770] sm:$0xff]
        %v702 = vld [vmem:[%s279 + $0x778] sm:$0xff]
        %v703 = vld [vmem:[%s279 + $0x780] sm:$0xff]
        %v704 = vld [vmem:[%s279 + $0x788] sm:$0xff]
        %v705 = vld [vmem:[%s279 + $0x790] sm:$0xff]
        %v706 = vld [vmem:[%s279 + $0x798] sm:$0xff]
        %v707 = vld [vmem:[%s279 + $0x7a0] sm:$0xff]
        %v708 = vld [vmem:[%s279 + $0x7a8] sm:$0xff]
        %v709 = vld [vmem:[%s279 + $0x7b0] sm:$0xff]
        %v710 = vld [vmem:[%s279 + $0x7b8] sm:$0xff]
        %v711 = vld [vmem:[%s279 + $0x7c0] sm:$0xff]
        %v712 = vld [vmem:[%s279 + $0x7c8] sm:$0xff]
        %v713 = vld [vmem:[%s279 + $0x7d0] sm:$0xff]
        %v714 = vld [vmem:[%s279 + $0x7d8] sm:$0xff]
        %v715 = vld [vmem:[%s279 + $0x7e0] sm:$0xff]
        %v716 = vld [vmem:[%s279 + $0x7e8] sm:$0xff]
        %v717 = vld [vmem:[%s279 + $0x7f0] sm:$0xff]
        %v718 = vld [vmem:[%s279 + $0x7f8] sm:$0xff]
        %v719 = vld [vmem:[#allocation7] sm:$0xff]
        %v720 = vld [vmem:[#allocation7 + $0x8] sm:$0xff]
        %v721 = vld [vmem:[#allocation7 + $0x10] sm:$0xff]
        %v722 = vld [vmem:[#allocation7 + $0x18] sm:$0xff]
        %v723 = vld [vmem:[#allocation7 + $0x20] sm:$0xff]
        %v724 = vld [vmem:[#allocation7 + $0x28] sm:$0xff]
        %v725 = vld [vmem:[#allocation7 + $0x30] sm:$0xff]
        %v726 = vld [vmem:[#allocation7 + $0x38] sm:$0xff]
        %v727 = vld [vmem:[#allocation7 + $0x40] sm:$0xff]
        %v728 = vld [vmem:[#allocation7 + $0x48] sm:$0xff]
        %v729 = vld [vmem:[#allocation7 + $0x50] sm:$0xff]
        %v730 = vld [vmem:[#allocation7 + $0x58] sm:$0xff]
        %v731 = vld [vmem:[#allocation7 + $0x60] sm:$0xff]
        %v732 = vld [vmem:[#allocation7 + $0x68] sm:$0xff]
        %v733 = vld [vmem:[#allocation7 + $0x70] sm:$0xff]
        %v734 = vld [vmem:[#allocation7 + $0x78] sm:$0xff]
        %v735 = vld [vmem:[#allocation7 + $0x80] sm:$0xff]
        %v736 = vld [vmem:[#allocation7 + $0x88] sm:$0xff]
        %v737 = vld [vmem:[#allocation7 + $0x90] sm:$0xff]
        %v738 = vld [vmem:[#allocation7 + $0x98] sm:$0xff]
        %v739 = vld [vmem:[#allocation7 + $0xa0] sm:$0xff]
        %v740 = vld [vmem:[#allocation7 + $0xa8] sm:$0xff]
        %v741 = vld [vmem:[#allocation7 + $0xb0] sm:$0xff]
        %v742 = vld [vmem:[#allocation7 + $0xb8] sm:$0xff]
        %v743 = vld [vmem:[#allocation7 + $0xc0] sm:$0xff]
        %v744 = vld [vmem:[#allocation7 + $0xc8] sm:$0xff]
        %v745 = vld [vmem:[#allocation7 + $0xd0] sm:$0xff]
        %v746 = vld [vmem:[#allocation7 + $0xd8] sm:$0xff]
        %v747 = vld [vmem:[#allocation7 + $0xe0] sm:$0xff]
        %v748 = vld [vmem:[#allocation7 + $0xe8] sm:$0xff]
        %v749 = vld [vmem:[#allocation7 + $0xf0] sm:$0xff]
        %v750 = vld [vmem:[#allocation7 + $0xf8] sm:$0xff]
        %v751 = vld [vmem:[#allocation7 + $0x100] sm:$0xff]
        %v752 = vld [vmem:[#allocation7 + $0x108] sm:$0xff]
        %v753 = vld [vmem:[#allocation7 + $0x110] sm:$0xff]
        %v754 = vld [vmem:[#allocation7 + $0x118] sm:$0xff]
        %v755 = vld [vmem:[#allocation7 + $0x120] sm:$0xff]
        %v756 = vld [vmem:[#allocation7 + $0x128] sm:$0xff]
        %v757 = vld [vmem:[#allocation7 + $0x130] sm:$0xff]
        %v758 = vld [vmem:[#allocation7 + $0x138] sm:$0xff]
        %v759 = vld [vmem:[#allocation7 + $0x140] sm:$0xff]
        %v760 = vld [vmem:[#allocation7 + $0x148] sm:$0xff]
        %v761 = vld [vmem:[#allocation7 + $0x150] sm:$0xff]
        %v762 = vld [vmem:[#allocation7 + $0x158] sm:$0xff]
        %v763 = vld [vmem:[#allocation7 + $0x160] sm:$0xff]
        %v764 = vld [vmem:[#allocation7 + $0x168] sm:$0xff]
        %v765 = vld [vmem:[#allocation7 + $0x170] sm:$0xff]
        %v766 = vld [vmem:[#allocation7 + $0x178] sm:$0xff]
        %v767 = vld [vmem:[#allocation7 + $0x180] sm:$0xff]
        %v768 = vld [vmem:[#allocation7 + $0x188] sm:$0xff]
        %v769 = vld [vmem:[#allocation7 + $0x190] sm:$0xff]
        %v770 = vld [vmem:[#allocation7 + $0x198] sm:$0xff]
        %v771 = vld [vmem:[#allocation7 + $0x1a0] sm:$0xff]
        %v772 = vld [vmem:[#allocation7 + $0x1a8] sm:$0xff]
        %v773 = vld [vmem:[#allocation7 + $0x1b0] sm:$0xff]
        %v774 = vld [vmem:[#allocation7 + $0x1b8] sm:$0xff]
        %v775 = vld [vmem:[#allocation7 + $0x1c0] sm:$0xff]
        %v776 = vld [vmem:[#allocation7 + $0x1c8] sm:$0xff]
        %v777 = vld [vmem:[#allocation7 + $0x1d0] sm:$0xff]
        %v778 = vld [vmem:[#allocation7 + $0x1d8] sm:$0xff]
        %v779 = vld [vmem:[#allocation7 + $0x1e0] sm:$0xff]
        %v780 = vld [vmem:[#allocation7 + $0x1e8] sm:$0xff]
        %v781 = vld [vmem:[#allocation7 + $0x1f0] sm:$0xff]
        %v782 = vld [vmem:[#allocation7 + $0x1f8] sm:$0xff]
        %v783 = vld [vmem:[#allocation7 + $0x200] sm:$0xff]
        %v784 = vld [vmem:[#allocation7 + $0x208] sm:$0xff]
        %v785 = vld [vmem:[#allocation7 + $0x210] sm:$0xff]
        %v786 = vld [vmem:[#allocation7 + $0x218] sm:$0xff]
        %v787 = vld [vmem:[#allocation7 + $0x220] sm:$0xff]
        %v788 = vld [vmem:[#allocation7 + $0x228] sm:$0xff]
        %v789 = vld [vmem:[#allocation7 + $0x230] sm:$0xff]
        %v790 = vld [vmem:[#allocation7 + $0x238] sm:$0xff]
        %v791 = vld [vmem:[#allocation7 + $0x240] sm:$0xff]
        %v792 = vld [vmem:[#allocation7 + $0x248] sm:$0xff]
        %v793 = vld [vmem:[#allocation7 + $0x250] sm:$0xff]
        %v794 = vld [vmem:[#allocation7 + $0x258] sm:$0xff]
        %v795 = vld [vmem:[#allocation7 + $0x260] sm:$0xff]
        %v796 = vld [vmem:[#allocation7 + $0x268] sm:$0xff]
        %v797 = vld [vmem:[#allocation7 + $0x270] sm:$0xff]
        %v798 = vld [vmem:[#allocation7 + $0x278] sm:$0xff]
        %v799 = vld [vmem:[#allocation7 + $0x280] sm:$0xff]
        %v800 = vld [vmem:[#allocation7 + $0x288] sm:$0xff]
        %v801 = vld [vmem:[#allocation7 + $0x290] sm:$0xff]
        %v802 = vld [vmem:[#allocation7 + $0x298] sm:$0xff]
        %v803 = vld [vmem:[#allocation7 + $0x2a0] sm:$0xff]
        %v804 = vld [vmem:[#allocation7 + $0x2a8] sm:$0xff]
        %v805 = vld [vmem:[#allocation7 + $0x2b0] sm:$0xff]
        %v806 = vld [vmem:[#allocation7 + $0x2b8] sm:$0xff]
        %v807 = vld [vmem:[#allocation7 + $0x2c0] sm:$0xff]
        %v808 = vld [vmem:[#allocation7 + $0x2c8] sm:$0xff]
        %v809 = vld [vmem:[#allocation7 + $0x2d0] sm:$0xff]
        %v810 = vld [vmem:[#allocation7 + $0x2d8] sm:$0xff]
        %v811 = vld [vmem:[#allocation7 + $0x2e0] sm:$0xff]
        %v812 = vld [vmem:[#allocation7 + $0x2e8] sm:$0xff]
        %v813 = vld [vmem:[#allocation7 + $0x2f0] sm:$0xff]
        %v814 = vld [vmem:[#allocation7 + $0x2f8] sm:$0xff]
        %v815 = vld [vmem:[#allocation7 + $0x300] sm:$0xff]
        %v816 = vld [vmem:[#allocation7 + $0x308] sm:$0xff]
        %v817 = vld [vmem:[#allocation7 + $0x310] sm:$0xff]
        %v818 = vld [vmem:[#allocation7 + $0x318] sm:$0xff]
        %v819 = vld [vmem:[#allocation7 + $0x320] sm:$0xff]
        %v820 = vld [vmem:[#allocation7 + $0x328] sm:$0xff]
        %v821 = vld [vmem:[#allocation7 + $0x330] sm:$0xff]
        %v822 = vld [vmem:[#allocation7 + $0x338] sm:$0xff]
        %v823 = vld [vmem:[#allocation7 + $0x340] sm:$0xff]
        %v824 = vld [vmem:[#allocation7 + $0x348] sm:$0xff]
        %v825 = vld [vmem:[#allocation7 + $0x350] sm:$0xff]
        %v826 = vld [vmem:[#allocation7 + $0x358] sm:$0xff]
        %v827 = vld [vmem:[#allocation7 + $0x360] sm:$0xff]
        %v828 = vld [vmem:[#allocation7 + $0x368] sm:$0xff]
        %v829 = vld [vmem:[#allocation7 + $0x370] sm:$0xff]
        %v830 = vld [vmem:[#allocation7 + $0x378] sm:$0xff]
        %v831 = vld [vmem:[#allocation7 + $0x380] sm:$0xff]
        %v832 = vld [vmem:[#allocation7 + $0x388] sm:$0xff]
        %v833 = vld [vmem:[#allocation7 + $0x390] sm:$0xff]
        %v834 = vld [vmem:[#allocation7 + $0x398] sm:$0xff]
        %v835 = vld [vmem:[#allocation7 + $0x3a0] sm:$0xff]
        %v836 = vld [vmem:[#allocation7 + $0x3a8] sm:$0xff]
        %v837 = vld [vmem:[#allocation7 + $0x3b0] sm:$0xff]
        %v838 = vld [vmem:[#allocation7 + $0x3b8] sm:$0xff]
        %v839 = vld [vmem:[#allocation7 + $0x3c0] sm:$0xff]
        %v840 = vld [vmem:[#allocation7 + $0x3c8] sm:$0xff]
        %v841 = vld [vmem:[#allocation7 + $0x3d0] sm:$0xff]
        %v842 = vld [vmem:[#allocation7 + $0x3d8] sm:$0xff]
        %v843 = vld [vmem:[#allocation7 + $0x3e0] sm:$0xff]
        %v844 = vld [vmem:[#allocation7 + $0x3e8] sm:$0xff]
        %v845 = vld [vmem:[#allocation7 + $0x3f0] sm:$0xff]
        %v846 = vld [vmem:[#allocation7 + $0x3f8] sm:$0xff]
        %v847 = vld [vmem:[#allocation7 + $0x400] sm:$0xff]
        %v848 = vld [vmem:[#allocation7 + $0x408] sm:$0xff]
        %v849 = vld [vmem:[#allocation7 + $0x410] sm:$0xff]
        %v850 = vld [vmem:[#allocation7 + $0x418] sm:$0xff]
        %v851 = vld [vmem:[#allocation7 + $0x420] sm:$0xff]
        %v852 = vld [vmem:[#allocation7 + $0x428] sm:$0xff]
        %v853 = vld [vmem:[#allocation7 + $0x430] sm:$0xff]
        %v854 = vld [vmem:[#allocation7 + $0x438] sm:$0xff]
        %v855 = vld [vmem:[#allocation7 + $0x440] sm:$0xff]
        %v856 = vld [vmem:[#allocation7 + $0x448] sm:$0xff]
        %v857 = vld [vmem:[#allocation7 + $0x450] sm:$0xff]
        %v858 = vld [vmem:[#allocation7 + $0x458] sm:$0xff]
        %v859 = vld [vmem:[#allocation7 + $0x460] sm:$0xff]
        %v860 = vld [vmem:[#allocation7 + $0x468] sm:$0xff]
        %v861 = vld [vmem:[#allocation7 + $0x470] sm:$0xff]
        %v862 = vld [vmem:[#allocation7 + $0x478] sm:$0xff]
        %v863 = vld [vmem:[#allocation7 + $0x480] sm:$0xff]
        %v864 = vld [vmem:[#allocation7 + $0x488] sm:$0xff]
        %v865 = vld [vmem:[#allocation7 + $0x490] sm:$0xff]
        %v866 = vld [vmem:[#allocation7 + $0x498] sm:$0xff]
        %v867 = vld [vmem:[#allocation7 + $0x4a0] sm:$0xff]
        %v868 = vld [vmem:[#allocation7 + $0x4a8] sm:$0xff]
        %v869 = vld [vmem:[#allocation7 + $0x4b0] sm:$0xff]
        %v870 = vld [vmem:[#allocation7 + $0x4b8] sm:$0xff]
        %v871 = vld [vmem:[#allocation7 + $0x4c0] sm:$0xff]
        %v872 = vld [vmem:[#allocation7 + $0x4c8] sm:$0xff]
        %v873 = vld [vmem:[#allocation7 + $0x4d0] sm:$0xff]
        %v874 = vld [vmem:[#allocation7 + $0x4d8] sm:$0xff]
        %v875 = vld [vmem:[#allocation7 + $0x4e0] sm:$0xff]
        %v876 = vld [vmem:[#allocation7 + $0x4e8] sm:$0xff]
        %v877 = vld [vmem:[#allocation7 + $0x4f0] sm:$0xff]
        %v878 = vld [vmem:[#allocation7 + $0x4f8] sm:$0xff]
        %v879 = vld [vmem:[#allocation7 + $0x500] sm:$0xff]
        %v880 = vld [vmem:[#allocation7 + $0x508] sm:$0xff]
        %v881 = vld [vmem:[#allocation7 + $0x510] sm:$0xff]
        %v882 = vld [vmem:[#allocation7 + $0x518] sm:$0xff]
        %v883 = vld [vmem:[#allocation7 + $0x520] sm:$0xff]
        %v884 = vld [vmem:[#allocation7 + $0x528] sm:$0xff]
        %v885 = vld [vmem:[#allocation7 + $0x530] sm:$0xff]
        %v886 = vld [vmem:[#allocation7 + $0x538] sm:$0xff]
        %v887 = vld [vmem:[#allocation7 + $0x540] sm:$0xff]
        %v888 = vld [vmem:[#allocation7 + $0x548] sm:$0xff]
        %v889 = vld [vmem:[#allocation7 + $0x550] sm:$0xff]
        %v890 = vld [vmem:[#allocation7 + $0x558] sm:$0xff]
        %v891 = vld [vmem:[#allocation7 + $0x560] sm:$0xff]
        %v892 = vld [vmem:[#allocation7 + $0x568] sm:$0xff]
        %v893 = vld [vmem:[#allocation7 + $0x570] sm:$0xff]
        %v894 = vld [vmem:[#allocation7 + $0x578] sm:$0xff]
        %v895 = vld [vmem:[#allocation7 + $0x580] sm:$0xff]
        %v896 = vld [vmem:[#allocation7 + $0x588] sm:$0xff]
        %v897 = vld [vmem:[#allocation7 + $0x590] sm:$0xff]
        %v898 = vld [vmem:[#allocation7 + $0x598] sm:$0xff]
        %v899 = vld [vmem:[#allocation7 + $0x5a0] sm:$0xff]
        %v900 = vld [vmem:[#allocation7 + $0x5a8] sm:$0xff]
        %v901 = vld [vmem:[#allocation7 + $0x5b0] sm:$0xff]
        %v902 = vld [vmem:[#allocation7 + $0x5b8] sm:$0xff]
        %v903 = vld [vmem:[#allocation7 + $0x5c0] sm:$0xff]
        %v904 = vld [vmem:[#allocation7 + $0x5c8] sm:$0xff]
        %v905 = vld [vmem:[#allocation7 + $0x5d0] sm:$0xff]
        %v906 = vld [vmem:[#allocation7 + $0x5d8] sm:$0xff]
        %v907 = vld [vmem:[#allocation7 + $0x5e0] sm:$0xff]
        %v908 = vld [vmem:[#allocation7 + $0x5e8] sm:$0xff]
        %v909 = vld [vmem:[#allocation7 + $0x5f0] sm:$0xff]
        %v910 = vld [vmem:[#allocation7 + $0x5f8] sm:$0xff]
        %v911 = vld [vmem:[#allocation7 + $0x600] sm:$0xff]
        %v912 = vld [vmem:[#allocation7 + $0x608] sm:$0xff]
        %v913 = vld [vmem:[#allocation7 + $0x610] sm:$0xff]
        %v914 = vld [vmem:[#allocation7 + $0x618] sm:$0xff]
        %v915 = vld [vmem:[#allocation7 + $0x620] sm:$0xff]
        %v916 = vld [vmem:[#allocation7 + $0x628] sm:$0xff]
        %v917 = vld [vmem:[#allocation7 + $0x630] sm:$0xff]
        %v918 = vld [vmem:[#allocation7 + $0x638] sm:$0xff]
        %v919 = vld [vmem:[#allocation7 + $0x640] sm:$0xff]
        %v920 = vld [vmem:[#allocation7 + $0x648] sm:$0xff]
        %v921 = vld [vmem:[#allocation7 + $0x650] sm:$0xff]
        %v922 = vld [vmem:[#allocation7 + $0x658] sm:$0xff]
        %v923 = vld [vmem:[#allocation7 + $0x660] sm:$0xff]
        %v924 = vld [vmem:[#allocation7 + $0x668] sm:$0xff]
        %v925 = vld [vmem:[#allocation7 + $0x670] sm:$0xff]
        %v926 = vld [vmem:[#allocation7 + $0x678] sm:$0xff]
        %v927 = vld [vmem:[#allocation7 + $0x680] sm:$0xff]
        %v928 = vld [vmem:[#allocation7 + $0x688] sm:$0xff]
        %v929 = vld [vmem:[#allocation7 + $0x690] sm:$0xff]
        %v930 = vld [vmem:[#allocation7 + $0x698] sm:$0xff]
        %v931 = vld [vmem:[#allocation7 + $0x6a0] sm:$0xff]
        %v932 = vld [vmem:[#allocation7 + $0x6a8] sm:$0xff]
        %v933 = vld [vmem:[#allocation7 + $0x6b0] sm:$0xff]
        %v934 = vld [vmem:[#allocation7 + $0x6b8] sm:$0xff]
        %v935 = vld [vmem:[#allocation7 + $0x6c0] sm:$0xff]
        %v936 = vld [vmem:[#allocation7 + $0x6c8] sm:$0xff]
        %v937 = vld [vmem:[#allocation7 + $0x6d0] sm:$0xff]
        %v938 = vld [vmem:[#allocation7 + $0x6d8] sm:$0xff]
        %v939 = vld [vmem:[#allocation7 + $0x6e0] sm:$0xff]
        %v940 = vld [vmem:[#allocation7 + $0x6e8] sm:$0xff]
        %v941 = vld [vmem:[#allocation7 + $0x6f0] sm:$0xff]
        %v942 = vld [vmem:[#allocation7 + $0x6f8] sm:$0xff]
        %v943 = vld [vmem:[#allocation7 + $0x700] sm:$0xff]
        %v944 = vld [vmem:[#allocation7 + $0x708] sm:$0xff]
        %v945 = vld [vmem:[#allocation7 + $0x710] sm:$0xff]
        %v946 = vld [vmem:[#allocation7 + $0x718] sm:$0xff]
        %v947 = vld [vmem:[#allocation7 + $0x720] sm:$0xff]
        %v948 = vld [vmem:[#allocation7 + $0x728] sm:$0xff]
        %v949 = vld [vmem:[#allocation7 + $0x730] sm:$0xff]
        %v950 = vld [vmem:[#allocation7 + $0x738] sm:$0xff]
        %v951 = vld [vmem:[#allocation7 + $0x740] sm:$0xff]
        %v952 = vld [vmem:[#allocation7 + $0x748] sm:$0xff]
        %v953 = vld [vmem:[#allocation7 + $0x750] sm:$0xff]
        %v954 = vld [vmem:[#allocation7 + $0x758] sm:$0xff]
        %v955 = vld [vmem:[#allocation7 + $0x760] sm:$0xff]
        %v956 = vld [vmem:[#allocation7 + $0x768] sm:$0xff]
        %v957 = vld [vmem:[#allocation7 + $0x770] sm:$0xff]
        %v958 = vld [vmem:[#allocation7 + $0x778] sm:$0xff]
        %v959 = vld [vmem:[#allocation7 + $0x780] sm:$0xff]
        %v960 = vld [vmem:[#allocation7 + $0x788] sm:$0xff]
        %v961 = vld [vmem:[#allocation7 + $0x790] sm:$0xff]
        %v962 = vld [vmem:[#allocation7 + $0x798] sm:$0xff]
        %v963 = vld [vmem:[#allocation7 + $0x7a0] sm:$0xff]
        %v964 = vld [vmem:[#allocation7 + $0x7a8] sm:$0xff]
        %v965 = vld [vmem:[#allocation7 + $0x7b0] sm:$0xff]
        %v966 = vld [vmem:[#allocation7 + $0x7b8] sm:$0xff]
        %v967 = vld [vmem:[#allocation7 + $0x7c0] sm:$0xff]
        %v968 = vld [vmem:[#allocation7 + $0x7c8] sm:$0xff]
        %v969 = vld [vmem:[#allocation7 + $0x7d0] sm:$0xff]
        %v970 = vld [vmem:[#allocation7 + $0x7d8] sm:$0xff]
        %v971 = vld [vmem:[#allocation7 + $0x7e0] sm:$0xff]
        %v972 = vld [vmem:[#allocation7 + $0x7e8] sm:$0xff]
        %v973 = vld [vmem:[#allocation7 + $0x7f0] sm:$0xff]
        %v974 = vld [vmem:[#allocation7 + $0x7f8] sm:$0xff]
        %975 = vmatprep.subr.mxu0 %v720
        %976 = vmatpush1.msra.mxu0 %v719
        %977 = vmatprep.subr.mxu0 %v722
        %978 = vmatpush1.msra.mxu0 %v721
        %979 = vmatprep.subr.mxu0 %v724
        %980 = vmatpush1.msra.mxu0 %v723
        %981 = vmatprep.subr.mxu0 %v726
        %982 = vmatpush1.msra.mxu0 %v725
        %983 = vmatprep.subr.mxu0 %v728
        %984 = vmatpush1.msra.mxu0 %v727
        %985 = vmatprep.subr.mxu0 %v730
        %986 = vmatpush1.msra.mxu0 %v729
        %987 = vmatprep.subr.mxu0 %v732
        %988 = vmatpush1.msra.mxu0 %v731
        %989 = vmatprep.subr.mxu0 %v734
        %990 = vmatpush1.msra.mxu0 %v733
        %991 = vmatprep.subr.mxu0 %v736
        %992 = vmatpush1.msra.mxu0 %v735
        %993 = vmatprep.subr.mxu0 %v738
        %994 = vmatpush1.msra.mxu0 %v737
        %995 = vmatprep.subr.mxu0 %v740
        %996 = vmatpush1.msra.mxu0 %v739
        %997 = vmatprep.subr.mxu0 %v742
        %998 = vmatpush1.msra.mxu0 %v741
        %999 = vmatprep.subr.mxu0 %v744
        %1000 = vmatpush1.msra.mxu0 %v743
        %1001 = vmatprep.subr.mxu0 %v746
        %1002 = vmatpush1.msra.mxu0 %v745
        %1003 = vmatprep.subr.mxu0 %v748
        %1004 = vmatpush1.msra.mxu0 %v747
        %1005 = vmatprep.subr.mxu0 %v750
        %1006 = vmatpush1.msra.mxu0 %v749
        %1007 = vmatprep.subr.mxu0 %v752
        %1008 = vmatpush1.msra.mxu0 %v751
        %1009 = vmatprep.subr.mxu0 %v754
        %1010 = vmatpush1.msra.mxu0 %v753
        %1011 = vmatprep.subr.mxu0 %v756
        %1012 = vmatpush1.msra.mxu0 %v755
        %1013 = vmatprep.subr.mxu0 %v758
        %1014 = vmatpush1.msra.mxu0 %v757
        %1015 = vmatprep.subr.mxu0 %v760
        %1016 = vmatpush1.msra.mxu0 %v759
        %1017 = vmatprep.subr.mxu0 %v762
        %1018 = vmatpush1.msra.mxu0 %v761
        %1019 = vmatprep.subr.mxu0 %v764
        %1020 = vmatpush1.msra.mxu0 %v763
        %1021 = vmatprep.subr.mxu0 %v766
        %1022 = vmatpush1.msra.mxu0 %v765
        %1023 = vmatprep.subr.mxu0 %v768
        %1024 = vmatpush1.msra.mxu0 %v767
        %1025 = vmatprep.subr.mxu0 %v770
        %1026 = vmatpush1.msra.mxu0 %v769
        %1027 = vmatprep.subr.mxu0 %v772
        %1028 = vmatpush1.msra.mxu0 %v771
        %1029 = vmatprep.subr.mxu0 %v774
        %1030 = vmatpush1.msra.mxu0 %v773
        %1031 = vmatprep.subr.mxu0 %v776
        %1032 = vmatpush1.msra.mxu0 %v775
        %1033 = vmatprep.subr.mxu0 %v778
        %1034 = vmatpush1.msra.mxu0 %v777
        %1035 = vmatprep.subr.mxu0 %v780
        %1036 = vmatpush1.msra.mxu0 %v779
        %1037 = vmatprep.subr.mxu0 %v782
        %1038 = vmatpush1.msra.mxu0 %v781
        %1039 = vmatprep.mubr.f32.mxu0 %v464
        %1040 = vmatmul.mubr.f32.gmra.mrb[0].mxu0 %v463
        %v1041 = vpop.f32.mrb[0].mxu0
        %v1042 = vadd.f32 0.0, %v1041
        %v1043 = vpop.f32.mrb[0].mxu0
        %v1044 = vadd.f32 0.0, %v1043
        %1045 = vmatprep.mubr.f32.mxu0 %v472
        %1046 = vmatmul.mubr.f32.gmra.mrb[0].mxu0 %v471
        %v1047 = vpop.f32.mrb[0].mxu0
        %v1048 = vadd.f32 0.0, %v1047
        %v1049 = vpop.f32.mrb[0].mxu0
        %v1050 = vadd.f32 0.0, %v1049
        %1051 = vmatprep.mubr.f32.mxu0 %v480
        %1052 = vmatmul.mubr.f32.gmra.mrb[0].mxu0 %v479
        %v1053 = vpop.f32.mrb[0].mxu0
        %v1054 = vadd.f32 0.0, %v1053
        %v1055 = vpop.f32.mrb[0].mxu0
        %v1056 = vadd.f32 0.0, %v1055
        %1057 = vmatprep.mubr.f32.mxu0 %v488
        %1058 = vmatmul.mubr.f32.gmra.mrb[0].mxu0 %v487
        %v1059 = vpop.f32.mrb[0].mxu0
        %v1060 = vadd.f32 0.0, %v1059
        %v1061 = vpop.f32.mrb[0].mxu0
        %v1062 = vadd.f32 0.0, %v1061
        %1063 = vmatprep.mubr.f32.mxu0 %v496
        %1064 = vmatmul.mubr.f32.gmra.mrb[0].mxu0 %v495
        %v1065 = vpop.f32.mrb[0].mxu0
        %v1066 = vadd.f32 0.0, %v1065
        %v1067 = vpop.f32.mrb[0].mxu0
        %v1068 = vadd.f32 0.0, %v1067
        %1069 = vmatprep.mubr.f32.mxu0 %v504
        %1070 = vmatmul.mubr.f32.gmra.mrb[0].mxu0 %v503
        %v1071 = vpop.f32.mrb[0].mxu0
        %v1072 = vadd.f32 0.0, %v1071
        %v1073 = vpop.f32.mrb[0].mxu0
        %v1074 = vadd.f32 0.0, %v1073
        %1075 = vmatprep.mubr.f32.mxu0 %v512
        %1076 = vmatmul.mubr.f32.gmra.mrb[0].mxu0 %v511
        %v1077 = vpop.f32.mrb[0].mxu0
        %v1078 = vadd.f32 0.0, %v1077
        %v1079 = vpop.f32.mrb[0].mxu0
        %v1080 = vadd.f32 0.0, %v1079
        %1081 = vmatprep.mubr.f32.mxu0 %v520
        %1082 = vmatmul.mubr.f32.gmra.mrb[0].mxu0 %v519
        %v1083 = vpop.f32.mrb[0].mxu0
        %v1084 = vadd.f32 0.0, %v1083
        %v1085 = vpop.f32.mrb[0].mxu0
        %v1086 = vadd.f32 0.0, %v1085
        %1087 = vmatprep.mubr.f32.mxu0 %v528
        %1088 = vmatmul.mubr.f32.gmra.mrb[0].mxu0 %v527
        %v1089 = vpop.f32.mrb[0].mxu0
        %v1090 = vadd.f32 0.0, %v1089
        %v1091 = vpop.f32.mrb[0].mxu0
        %v1092 = vadd.f32 0.0, %v1091
        %1093 = vmatprep.mubr.f32.mxu0 %v536
        %1094 = vmatmul.mubr.f32.gmra.mrb[0].mxu0 %v535
        %v1095 = vpop.f32.mrb[0].mxu0
        %v1096 = vadd.f32 0.0, %v1095
        %v1097 = vpop.f32.mrb[0].mxu0
        %v1098 = vadd.f32 0.0, %v1097
        %1099 = vmatprep.mubr.f32.mxu0 %v544
        %1100 = vmatmul.mubr.f32.gmra.mrb[0].mxu0 %v543
        %v1101 = vpop.f32.mrb[0].mxu0
        %v1102 = vadd.f32 0.0, %v1101
        %v1103 = vpop.f32.mrb[0].mxu0
        %v1104 = vadd.f32 0.0, %v1103
        %1105 = vmatprep.mubr.f32.mxu0 %v552
        %1106 = vmatmul.mubr.f32.gmra.mrb[0].mxu0 %v551
        %v1107 = vpop.f32.mrb[0].mxu0
        %v1108 = vadd.f32 0.0, %v1107
        %v1109 = vpop.f32.mrb[0].mxu0
        %v1110 = vadd.f32 0.0, %v1109
        %1111 = vmatprep.mubr.f32.mxu0 %v560
        %1112 = vmatmul.mubr.f32.gmra.mrb[0].mxu0 %v559
        %v1113 = vpop.f32.mrb[0].mxu0
        %v1114 = vadd.f32 0.0, %v1113
        %v1115 = vpop.f32.mrb[0].mxu0
        %v1116 = vadd.f32 0.0, %v1115
        %1117 = vmatprep.mubr.f32.mxu0 %v568
        %1118 = vmatmul.mubr.f32.gmra.mrb[0].mxu0 %v567
        %v1119 = vpop.f32.mrb[0].mxu0
        %v1120 = vadd.f32 0.0, %v1119
        %v1121 = vpop.f32.mrb[0].mxu0
        %v1122 = vadd.f32 0.0, %v1121
        %1123 = vmatprep.mubr.f32.mxu0 %v576
        %1124 = vmatmul.mubr.f32.gmra.mrb[0].mxu0 %v575
        %v1125 = vpop.f32.mrb[0].mxu0
        %v1126 = vadd.f32 0.0, %v1125
        %v1127 = vpop.f32.mrb[0].mxu0
        %v1128 = vadd.f32 0.0, %v1127
        %1129 = vmatprep.mubr.f32.mxu0 %v584
        %1130 = vmatmul.mubr.f32.gmra.mrb[0].mxu0 %v583
        %v1131 = vpop.f32.mrb[0].mxu0
        %v1132 = vadd.f32 0.0, %v1131
        %v1133 = vpop.f32.mrb[0].mxu0
        %v1134 = vadd.f32 0.0, %v1133
        %1135 = vmatprep.mubr.f32.mxu0 %v592
        %1136 = vmatmul.mubr.f32.gmra.mrb[0].mxu0 %v591
        %v1137 = vpop.f32.mrb[0].mxu0
        %v1138 = vadd.f32 0.0, %v1137
        %v1139 = vpop.f32.mrb[0].mxu0
        %v1140 = vadd.f32 0.0, %v1139
        %1141 = vmatprep.mubr.f32.mxu0 %v600
        %1142 = vmatmul.mubr.f32.gmra.mrb[0].mxu0 %v599
        %v1143 = vpop.f32.mrb[0].mxu0
        %v1144 = vadd.f32 0.0, %v1143
        %v1145 = vpop.f32.mrb[0].mxu0
        %v1146 = vadd.f32 0.0, %v1145
        %1147 = vmatprep.mubr.f32.mxu0 %v608
        %1148 = vmatmul.mubr.f32.gmra.mrb[0].mxu0 %v607
        %v1149 = vpop.f32.mrb[0].mxu0
        %v1150 = vadd.f32 0.0, %v1149
        %v1151 = vpop.f32.mrb[0].mxu0
        %v1152 = vadd.f32 0.0, %v1151
        %1153 = vmatprep.mubr.f32.mxu0 %v616
        %1154 = vmatmul.mubr.f32.gmra.mrb[0].mxu0 %v615
        %v1155 = vpop.f32.mrb[0].mxu0
        %v1156 = vadd.f32 0.0, %v1155
        %v1157 = vpop.f32.mrb[0].mxu0
        %v1158 = vadd.f32 0.0, %v1157
        %1159 = vmatprep.mubr.f32.mxu0 %v624
        %1160 = vmatmul.mubr.f32.gmra.mrb[0].mxu0 %v623
        %v1161 = vpop.f32.mrb[0].mxu0
        %v1162 = vadd.f32 0.0, %v1161
        %v1163 = vpop.f32.mrb[0].mxu0
        %v1164 = vadd.f32 0.0, %v1163
        %1165 = vmatprep.mubr.f32.mxu0 %v632
        %1166 = vmatmul.mubr.f32.gmra.mrb[0].mxu0 %v631
        %v1167 = vpop.f32.mrb[0].mxu0
        %v1168 = vadd.f32 0.0, %v1167
        %v1169 = vpop.f32.mrb[0].mxu0
        %v1170 = vadd.f32 0.0, %v1169
        %1171 = vmatprep.mubr.f32.mxu0 %v640
        %1172 = vmatmul.mubr.f32.gmra.mrb[0].mxu0 %v639
        %v1173 = vpop.f32.mrb[0].mxu0
        %v1174 = vadd.f32 0.0, %v1173
        %v1175 = vpop.f32.mrb[0].mxu0
        %v1176 = vadd.f32 0.0, %v1175
        %1177 = vmatprep.mubr.f32.mxu0 %v648
        %1178 = vmatmul.mubr.f32.gmra.mrb[0].mxu0 %v647
        %v1179 = vpop.f32.mrb[0].mxu0
        %v1180 = vadd.f32 0.0, %v1179
        %v1181 = vpop.f32.mrb[0].mxu0
        %v1182 = vadd.f32 0.0, %v1181
        %1183 = vmatprep.mubr.f32.mxu0 %v656
        %1184 = vmatmul.mubr.f32.gmra.mrb[0].mxu0 %v655
        %v1185 = vpop.f32.mrb[0].mxu0
        %v1186 = vadd.f32 0.0, %v1185
        %v1187 = vpop.f32.mrb[0].mxu0
        %v1188 = vadd.f32 0.0, %v1187
        %1189 = vmatprep.mubr.f32.mxu0 %v664
        %1190 = vmatmul.mubr.f32.gmra.mrb[0].mxu0 %v663
        %v1191 = vpop.f32.mrb[0].mxu0
        %v1192 = vadd.f32 0.0, %v1191
        %v1193 = vpop.f32.mrb[0].mxu0
        %v1194 = vadd.f32 0.0, %v1193
        %1195 = vmatprep.mubr.f32.mxu0 %v672
        %1196 = vmatmul.mubr.f32.gmra.mrb[0].mxu0 %v671
        %v1197 = vpop.f32.mrb[0].mxu0
        %v1198 = vadd.f32 0.0, %v1197
        %v1199 = vpop.f32.mrb[0].mxu0
        %v1200 = vadd.f32 0.0, %v1199
        %1201 = vmatprep.mubr.f32.mxu0 %v680
        %1202 = vmatmul.mubr.f32.gmra.mrb[0].mxu0 %v679
        %v1203 = vpop.f32.mrb[0].mxu0
        %v1204 = vadd.f32 0.0, %v1203
        %v1205 = vpop.f32.mrb[0].mxu0
        %v1206 = vadd.f32 0.0, %v1205
        %1207 = vmatprep.mubr.f32.mxu0 %v688
        %1208 = vmatmul.mubr.f32.gmra.mrb[0].mxu0 %v687
        %v1209 = vpop.f32.mrb[0].mxu0
        %v1210 = vadd.f32 0.0, %v1209
        %v1211 = vpop.f32.mrb[0].mxu0
        %v1212 = vadd.f32 0.0, %v1211
        %1213 = vmatprep.mubr.f32.mxu0 %v696
        %1214 = vmatmul.mubr.f32.gmra.mrb[0].mxu0 %v695
        %v1215 = vpop.f32.mrb[0].mxu0
        %v1216 = vadd.f32 0.0, %v1215
        %v1217 = vpop.f32.mrb[0].mxu0
        %v1218 = vadd.f32 0.0, %v1217
        %1219 = vmatprep.mubr.f32.mxu0 %v704
        %1220 = vmatmul.mubr.f32.gmra.mrb[0].mxu0 %v703
        %v1221 = vpop.f32.mrb[0].mxu0
        %v1222 = vadd.f32 0.0, %v1221
        %v1223 = vpop.f32.mrb[0].mxu0
        %v1224 = vadd.f32 0.0, %v1223
        %1225 = vmatprep.mubr.f32.mxu0 %v712
        %1226 = vmatmul.mubr.f32.gmra.mrb[0].mxu0 %v711
        %v1227 = vpop.f32.mrb[0].mxu0
        %v1228 = vadd.f32 0.0, %v1227
        %v1229 = vpop.f32.mrb[0].mxu0
        %v1230 = vadd.f32 0.0, %v1229
        %1231 = vdwg.mxu0
        %1232 = vmatprep.subr.mxu0 %v784
        %1233 = vmatpush1.msra.mxu0 %v783
        %1234 = vmatprep.subr.mxu0 %v786
        %1235 = vmatpush1.msra.mxu0 %v785
        %1236 = vmatprep.subr.mxu0 %v788
        %1237 = vmatpush1.msra.mxu0 %v787
        %1238 = vmatprep.subr.mxu0 %v790
        %1239 = vmatpush1.msra.mxu0 %v789
        %1240 = vmatprep.subr.mxu0 %v792
        %1241 = vmatpush1.msra.mxu0 %v791
        %1242 = vmatprep.subr.mxu0 %v794
        %1243 = vmatpush1.msra.mxu0 %v793
        %1244 = vmatprep.subr.mxu0 %v796
        %1245 = vmatpush1.msra.mxu0 %v795
        %1246 = vmatprep.subr.mxu0 %v798
        %1247 = vmatpush1.msra.mxu0 %v797
        %1248 = vmatprep.subr.mxu0 %v800
        %1249 = vmatpush1.msra.mxu0 %v799
        %1250 = vmatprep.subr.mxu0 %v802
        %1251 = vmatpush1.msra.mxu0 %v801
        %1252 = vmatprep.subr.mxu0 %v804
        %1253 = vmatpush1.msra.mxu0 %v803
        %1254 = vmatprep.subr.mxu0 %v806
        %1255 = vmatpush1.msra.mxu0 %v805
        %1256 = vmatprep.subr.mxu0 %v808
        %1257 = vmatpush1.msra.mxu0 %v807
        %1258 = vmatprep.subr.mxu0 %v810
        %1259 = vmatpush1.msra.mxu0 %v809
        %1260 = vmatprep.subr.mxu0 %v812
        %1261 = vmatpush1.msra.mxu0 %v811
        %1262 = vmatprep.subr.mxu0 %v814
        %1263 = vmatpush1.msra.mxu0 %v813
        %1264 = vmatprep.subr.mxu0 %v816
        %1265 = vmatpush1.msra.mxu0 %v815
        %1266 = vmatprep.subr.mxu0 %v818
        %1267 = vmatpush1.msra.mxu0 %v817
        %1268 = vmatprep.subr.mxu0 %v820
        %1269 = vmatpush1.msra.mxu0 %v819
        %1270 = vmatprep.subr.mxu0 %v822
        %1271 = vmatpush1.msra.mxu0 %v821
        %1272 = vmatprep.subr.mxu0 %v824
        %1273 = vmatpush1.msra.mxu0 %v823
        %1274 = vmatprep.subr.mxu0 %v826
        %1275 = vmatpush1.msra.mxu0 %v825
        %1276 = vmatprep.subr.mxu0 %v828
        %1277 = vmatpush1.msra.mxu0 %v827
        %1278 = vmatprep.subr.mxu0 %v830
        %1279 = vmatpush1.msra.mxu0 %v829
        %1280 = vmatprep.subr.mxu0 %v832
        %1281 = vmatpush1.msra.mxu0 %v831
        %1282 = vmatprep.subr.mxu0 %v834
        %1283 = vmatpush1.msra.mxu0 %v833
        %1284 = vmatprep.subr.mxu0 %v836
        %1285 = vmatpush1.msra.mxu0 %v835
        %1286 = vmatprep.subr.mxu0 %v838
        %1287 = vmatpush1.msra.mxu0 %v837
        %1288 = vmatprep.subr.mxu0 %v840
        %1289 = vmatpush1.msra.mxu0 %v839
        %1290 = vmatprep.subr.mxu0 %v842
        %1291 = vmatpush1.msra.mxu0 %v841
        %1292 = vmatprep.subr.mxu0 %v844
        %1293 = vmatpush1.msra.mxu0 %v843
        %1294 = vmatprep.subr.mxu0 %v846
        %1295 = vmatpush1.msra.mxu0 %v845
        %1296 = vmatprep.mubr.f32.mxu0 %v466
        %1297 = vmatmul.mubr.f32.gmra.mrb[0].mxu0 %v465
        %v1298 = vpop.f32.mrb[0].mxu0
        %v1299 = vadd.f32 %v1042, %v1298
        %v1300 = vpop.f32.mrb[0].mxu0
        %v1301 = vadd.f32 %v1044, %v1300
        %1302 = vmatprep.mubr.f32.mxu0 %v474
        %1303 = vmatmul.mubr.f32.gmra.mrb[0].mxu0 %v473
        %v1304 = vpop.f32.mrb[0].mxu0
        %v1305 = vadd.f32 %v1048, %v1304
        %v1306 = vpop.f32.mrb[0].mxu0
        %v1307 = vadd.f32 %v1050, %v1306
        %1308 = vmatprep.mubr.f32.mxu0 %v482
        %1309 = vmatmul.mubr.f32.gmra.mrb[0].mxu0 %v481
        %v1310 = vpop.f32.mrb[0].mxu0
        %v1311 = vadd.f32 %v1054, %v1310
        %v1312 = vpop.f32.mrb[0].mxu0
        %v1313 = vadd.f32 %v1056, %v1312
        %1314 = vmatprep.mubr.f32.mxu0 %v490
        %1315 = vmatmul.mubr.f32.gmra.mrb[0].mxu0 %v489
        %v1316 = vpop.f32.mrb[0].mxu0
        %v1317 = vadd.f32 %v1060, %v1316
        %v1318 = vpop.f32.mrb[0].mxu0
        %v1319 = vadd.f32 %v1062, %v1318
        %1320 = vmatprep.mubr.f32.mxu0 %v498
        %1321 = vmatmul.mubr.f32.gmra.mrb[0].mxu0 %v497
        %v1322 = vpop.f32.mrb[0].mxu0
        %v1323 = vadd.f32 %v1066, %v1322
        %v1324 = vpop.f32.mrb[0].mxu0
        %v1325 = vadd.f32 %v1068, %v1324
        %1326 = vmatprep.mubr.f32.mxu0 %v506
        %1327 = vmatmul.mubr.f32.gmra.mrb[0].mxu0 %v505
        %v1328 = vpop.f32.mrb[0].mxu0
        %v1329 = vadd.f32 %v1072, %v1328
        %v1330 = vpop.f32.mrb[0].mxu0
        %v1331 = vadd.f32 %v1074, %v1330
        %1332 = vmatprep.mubr.f32.mxu0 %v514
        %1333 = vmatmul.mubr.f32.gmra.mrb[0].mxu0 %v513
        %v1334 = vpop.f32.mrb[0].mxu0
        %v1335 = vadd.f32 %v1078, %v1334
        %v1336 = vpop.f32.mrb[0].mxu0
        %v1337 = vadd.f32 %v1080, %v1336
        %1338 = vmatprep.mubr.f32.mxu0 %v522
        %1339 = vmatmul.mubr.f32.gmra.mrb[0].mxu0 %v521
        %v1340 = vpop.f32.mrb[0].mxu0
        %v1341 = vadd.f32 %v1084, %v1340
        %v1342 = vpop.f32.mrb[0].mxu0
        %v1343 = vadd.f32 %v1086, %v1342
        %1344 = vmatprep.mubr.f32.mxu0 %v530
        %1345 = vmatmul.mubr.f32.gmra.mrb[0].mxu0 %v529
        %v1346 = vpop.f32.mrb[0].mxu0
        %v1347 = vadd.f32 %v1090, %v1346
        %v1348 = vpop.f32.mrb[0].mxu0
        %v1349 = vadd.f32 %v1092, %v1348
        %1350 = vmatprep.mubr.f32.mxu0 %v538
        %1351 = vmatmul.mubr.f32.gmra.mrb[0].mxu0 %v537
        %v1352 = vpop.f32.mrb[0].mxu0
        %v1353 = vadd.f32 %v1096, %v1352
        %v1354 = vpop.f32.mrb[0].mxu0
        %v1355 = vadd.f32 %v1098, %v1354
        %1356 = vmatprep.mubr.f32.mxu0 %v546
        %1357 = vmatmul.mubr.f32.gmra.mrb[0].mxu0 %v545
        %v1358 = vpop.f32.mrb[0].mxu0
        %v1359 = vadd.f32 %v1102, %v1358
        %v1360 = vpop.f32.mrb[0].mxu0
        %v1361 = vadd.f32 %v1104, %v1360
        %1362 = vmatprep.mubr.f32.mxu0 %v554
        %1363 = vmatmul.mubr.f32.gmra.mrb[0].mxu0 %v553
        %v1364 = vpop.f32.mrb[0].mxu0
        %v1365 = vadd.f32 %v1108, %v1364
        %v1366 = vpop.f32.mrb[0].mxu0
        %v1367 = vadd.f32 %v1110, %v1366
        %1368 = vmatprep.mubr.f32.mxu0 %v562
        %1369 = vmatmul.mubr.f32.gmra.mrb[0].mxu0 %v561
        %v1370 = vpop.f32.mrb[0].mxu0
        %v1371 = vadd.f32 %v1114, %v1370
        %v1372 = vpop.f32.mrb[0].mxu0
        %v1373 = vadd.f32 %v1116, %v1372
        %1374 = vmatprep.mubr.f32.mxu0 %v570
        %1375 = vmatmul.mubr.f32.gmra.mrb[0].mxu0 %v569
        %v1376 = vpop.f32.mrb[0].mxu0
        %v1377 = vadd.f32 %v1120, %v1376
        %v1378 = vpop.f32.mrb[0].mxu0
        %v1379 = vadd.f32 %v1122, %v1378
        %1380 = vmatprep.mubr.f32.mxu0 %v578
        %1381 = vmatmul.mubr.f32.gmra.mrb[0].mxu0 %v577
        %v1382 = vpop.f32.mrb[0].mxu0
        %v1383 = vadd.f32 %v1126, %v1382
        %v1384 = vpop.f32.mrb[0].mxu0
        %v1385 = vadd.f32 %v1128, %v1384
        %1386 = vmatprep.mubr.f32.mxu0 %v586
        %1387 = vmatmul.mubr.f32.gmra.mrb[0].mxu0 %v585
        %v1388 = vpop.f32.mrb[0].mxu0
        %v1389 = vadd.f32 %v1132, %v1388
        %v1390 = vpop.f32.mrb[0].mxu0
        %v1391 = vadd.f32 %v1134, %v1390
        %1392 = vmatprep.mubr.f32.mxu0 %v594
        %1393 = vmatmul.mubr.f32.gmra.mrb[0].mxu0 %v593
        %v1394 = vpop.f32.mrb[0].mxu0
        %v1395 = vadd.f32 %v1138, %v1394
        %v1396 = vpop.f32.mrb[0].mxu0
        %v1397 = vadd.f32 %v1140, %v1396
        %1398 = vmatprep.mubr.f32.mxu0 %v602
        %1399 = vmatmul.mubr.f32.gmra.mrb[0].mxu0 %v601
        %v1400 = vpop.f32.mrb[0].mxu0
        %v1401 = vadd.f32 %v1144, %v1400
        %v1402 = vpop.f32.mrb[0].mxu0
        %v1403 = vadd.f32 %v1146, %v1402
        %1404 = vmatprep.mubr.f32.mxu0 %v610
        %1405 = vmatmul.mubr.f32.gmra.mrb[0].mxu0 %v609
        %v1406 = vpop.f32.mrb[0].mxu0
        %v1407 = vadd.f32 %v1150, %v1406
        %v1408 = vpop.f32.mrb[0].mxu0
        %v1409 = vadd.f32 %v1152, %v1408
        %1410 = vmatprep.mubr.f32.mxu0 %v618
        %1411 = vmatmul.mubr.f32.gmra.mrb[0].mxu0 %v617
        %v1412 = vpop.f32.mrb[0].mxu0
        %v1413 = vadd.f32 %v1156, %v1412
        %v1414 = vpop.f32.mrb[0].mxu0
        %v1415 = vadd.f32 %v1158, %v1414
        %1416 = vmatprep.mubr.f32.mxu0 %v626
        %1417 = vmatmul.mubr.f32.gmra.mrb[0].mxu0 %v625
        %v1418 = vpop.f32.mrb[0].mxu0
        %v1419 = vadd.f32 %v1162, %v1418
        %v1420 = vpop.f32.mrb[0].mxu0
        %v1421 = vadd.f32 %v1164, %v1420
        %1422 = vmatprep.mubr.f32.mxu0 %v634
        %1423 = vmatmul.mubr.f32.gmra.mrb[0].mxu0 %v633
        %v1424 = vpop.f32.mrb[0].mxu0
        %v1425 = vadd.f32 %v1168, %v1424
        %v1426 = vpop.f32.mrb[0].mxu0
        %v1427 = vadd.f32 %v1170, %v1426
        %1428 = vmatprep.mubr.f32.mxu0 %v642
        %1429 = vmatmul.mubr.f32.gmra.mrb[0].mxu0 %v641
        %v1430 = vpop.f32.mrb[0].mxu0
        %v1431 = vadd.f32 %v1174, %v1430
        %v1432 = vpop.f32.mrb[0].mxu0
        %v1433 = vadd.f32 %v1176, %v1432
        %1434 = vmatprep.mubr.f32.mxu0 %v650
        %1435 = vmatmul.mubr.f32.gmra.mrb[0].mxu0 %v649
        %v1436 = vpop.f32.mrb[0].mxu0
        %v1437 = vadd.f32 %v1180, %v1436
        %v1438 = vpop.f32.mrb[0].mxu0
        %v1439 = vadd.f32 %v1182, %v1438
        %1440 = vmatprep.mubr.f32.mxu0 %v658
        %1441 = vmatmul.mubr.f32.gmra.mrb[0].mxu0 %v657
        %v1442 = vpop.f32.mrb[0].mxu0
        %v1443 = vadd.f32 %v1186, %v1442
        %v1444 = vpop.f32.mrb[0].mxu0
        %v1445 = vadd.f32 %v1188, %v1444
        %1446 = vmatprep.mubr.f32.mxu0 %v666
        %1447 = vmatmul.mubr.f32.gmra.mrb[0].mxu0 %v665
        %v1448 = vpop.f32.mrb[0].mxu0
        %v1449 = vadd.f32 %v1192, %v1448
        %v1450 = vpop.f32.mrb[0].mxu0
        %v1451 = vadd.f32 %v1194, %v1450
        %1452 = vmatprep.mubr.f32.mxu0 %v674
        %1453 = vmatmul.mubr.f32.gmra.mrb[0].mxu0 %v673
        %v1454 = vpop.f32.mrb[0].mxu0
        %v1455 = vadd.f32 %v1198, %v1454
        %v1456 = vpop.f32.mrb[0].mxu0
        %v1457 = vadd.f32 %v1200, %v1456
        %1458 = vmatprep.mubr.f32.mxu0 %v682
        %1459 = vmatmul.mubr.f32.gmra.mrb[0].mxu0 %v681
        %v1460 = vpop.f32.mrb[0].mxu0
        %v1461 = vadd.f32 %v1204, %v1460
        %v1462 = vpop.f32.mrb[0].mxu0
        %v1463 = vadd.f32 %v1206, %v1462
        %1464 = vmatprep.mubr.f32.mxu0 %v690
        %1465 = vmatmul.mubr.f32.gmra.mrb[0].mxu0 %v689
        %v1466 = vpop.f32.mrb[0].mxu0
        %v1467 = vadd.f32 %v1210, %v1466
        %v1468 = vpop.f32.mrb[0].mxu0
        %v1469 = vadd.f32 %v1212, %v1468
        %1470 = vmatprep.mubr.f32.mxu0 %v698
        %1471 = vmatmul.mubr.f32.gmra.mrb[0].mxu0 %v697
        %v1472 = vpop.f32.mrb[0].mxu0
        %v1473 = vadd.f32 %v1216, %v1472
        %v1474 = vpop.f32.mrb[0].mxu0
        %v1475 = vadd.f32 %v1218, %v1474
        %1476 = vmatprep.mubr.f32.mxu0 %v706
        %1477 = vmatmul.mubr.f32.gmra.mrb[0].mxu0 %v705
        %v1478 = vpop.f32.mrb[0].mxu0
        %v1479 = vadd.f32 %v1222, %v1478
        %v1480 = vpop.f32.mrb[0].mxu0
        %v1481 = vadd.f32 %v1224, %v1480
        %1482 = vmatprep.mubr.f32.mxu0 %v714
        %1483 = vmatmul.mubr.f32.gmra.mrb[0].mxu0 %v713
        %v1484 = vpop.f32.mrb[0].mxu0
        %v1485 = vadd.f32 %v1228, %v1484
        %v1486 = vpop.f32.mrb[0].mxu0
        %v1487 = vadd.f32 %v1230, %v1486
        %1488 = vdwg.mxu0
        %1489 = vmatprep.subr.mxu0 %v848
        %1490 = vmatpush1.msra.mxu0 %v847
        %1491 = vmatprep.subr.mxu0 %v850
        %1492 = vmatpush1.msra.mxu0 %v849
        %1493 = vmatprep.subr.mxu0 %v852
        %1494 = vmatpush1.msra.mxu0 %v851
        %1495 = vmatprep.subr.mxu0 %v854
        %1496 = vmatpush1.msra.mxu0 %v853
        %1497 = vmatprep.subr.mxu0 %v856
        %1498 = vmatpush1.msra.mxu0 %v855
        %1499 = vmatprep.subr.mxu0 %v858
        %1500 = vmatpush1.msra.mxu0 %v857
        %1501 = vmatprep.subr.mxu0 %v860
        %1502 = vmatpush1.msra.mxu0 %v859
        %1503 = vmatprep.subr.mxu0 %v862
        %1504 = vmatpush1.msra.mxu0 %v861
        %1505 = vmatprep.subr.mxu0 %v864
        %1506 = vmatpush1.msra.mxu0 %v863
        %1507 = vmatprep.subr.mxu0 %v866
        %1508 = vmatpush1.msra.mxu0 %v865
        %1509 = vmatprep.subr.mxu0 %v868
        %1510 = vmatpush1.msra.mxu0 %v867
        %1511 = vmatprep.subr.mxu0 %v870
        %1512 = vmatpush1.msra.mxu0 %v869
        %1513 = vmatprep.subr.mxu0 %v872
        %1514 = vmatpush1.msra.mxu0 %v871
        %1515 = vmatprep.subr.mxu0 %v874
        %1516 = vmatpush1.msra.mxu0 %v873
        %1517 = vmatprep.subr.mxu0 %v876
        %1518 = vmatpush1.msra.mxu0 %v875
        %1519 = vmatprep.subr.mxu0 %v878
        %1520 = vmatpush1.msra.mxu0 %v877
        %1521 = vmatprep.subr.mxu0 %v880
        %1522 = vmatpush1.msra.mxu0 %v879
        %1523 = vmatprep.subr.mxu0 %v882
        %1524 = vmatpush1.msra.mxu0 %v881
        %1525 = vmatprep.subr.mxu0 %v884
        %1526 = vmatpush1.msra.mxu0 %v883
        %1527 = vmatprep.subr.mxu0 %v886
        %1528 = vmatpush1.msra.mxu0 %v885
        %1529 = vmatprep.subr.mxu0 %v888
        %1530 = vmatpush1.msra.mxu0 %v887
        %1531 = vmatprep.subr.mxu0 %v890
        %1532 = vmatpush1.msra.mxu0 %v889
        %1533 = vmatprep.subr.mxu0 %v892
        %1534 = vmatpush1.msra.mxu0 %v891
        %1535 = vmatprep.subr.mxu0 %v894
        %1536 = vmatpush1.msra.mxu0 %v893
        %1537 = vmatprep.subr.mxu0 %v896
        %1538 = vmatpush1.msra.mxu0 %v895
        %1539 = vmatprep.subr.mxu0 %v898
        %1540 = vmatpush1.msra.mxu0 %v897
        %1541 = vmatprep.subr.mxu0 %v900
        %1542 = vmatpush1.msra.mxu0 %v899
        %1543 = vmatprep.subr.mxu0 %v902
        %1544 = vmatpush1.msra.mxu0 %v901
        %1545 = vmatprep.subr.mxu0 %v904
        %1546 = vmatpush1.msra.mxu0 %v903
        %1547 = vmatprep.subr.mxu0 %v906
        %1548 = vmatpush1.msra.mxu0 %v905
        %1549 = vmatprep.subr.mxu0 %v908
        %1550 = vmatpush1.msra.mxu0 %v907
        %1551 = vmatprep.subr.mxu0 %v910
        %1552 = vmatpush1.msra.mxu0 %v909
        %1553 = vmatprep.mubr.f32.mxu0 %v468
        %1554 = vmatmul.mubr.f32.gmra.mrb[0].mxu0 %v467
        %v1555 = vpop.f32.mrb[0].mxu0
        %v1556 = vadd.f32 %v1299, %v1555
        %v1557 = vpop.f32.mrb[0].mxu0
        %v1558 = vadd.f32 %v1301, %v1557
        %1559 = vmatprep.mubr.f32.mxu0 %v476
        %1560 = vmatmul.mubr.f32.gmra.mrb[0].mxu0 %v475
        %v1561 = vpop.f32.mrb[0].mxu0
        %v1562 = vadd.f32 %v1305, %v1561
        %v1563 = vpop.f32.mrb[0].mxu0
        %v1564 = vadd.f32 %v1307, %v1563
        %1565 = vmatprep.mubr.f32.mxu0 %v484
        %1566 = vmatmul.mubr.f32.gmra.mrb[0].mxu0 %v483
        %v1567 = vpop.f32.mrb[0].mxu0
        %v1568 = vadd.f32 %v1311, %v1567
        %v1569 = vpop.f32.mrb[0].mxu0
        %v1570 = vadd.f32 %v1313, %v1569
        %1571 = vmatprep.mubr.f32.mxu0 %v492
        %1572 = vmatmul.mubr.f32.gmra.mrb[0].mxu0 %v491
        %v1573 = vpop.f32.mrb[0].mxu0
        %v1574 = vadd.f32 %v1317, %v1573
        %v1575 = vpop.f32.mrb[0].mxu0
        %v1576 = vadd.f32 %v1319, %v1575
        %1577 = vmatprep.mubr.f32.mxu0 %v500
        %1578 = vmatmul.mubr.f32.gmra.mrb[0].mxu0 %v499
        %v1579 = vpop.f32.mrb[0].mxu0
        %v1580 = vadd.f32 %v1323, %v1579
        %v1581 = vpop.f32.mrb[0].mxu0
        %v1582 = vadd.f32 %v1325, %v1581
        %1583 = vmatprep.mubr.f32.mxu0 %v508
        %1584 = vmatmul.mubr.f32.gmra.mrb[0].mxu0 %v507
        %v1585 = vpop.f32.mrb[0].mxu0
        %v1586 = vadd.f32 %v1329, %v1585
        %v1587 = vpop.f32.mrb[0].mxu0
        %v1588 = vadd.f32 %v1331, %v1587
        %1589 = vmatprep.mubr.f32.mxu0 %v516
        %1590 = vmatmul.mubr.f32.gmra.mrb[0].mxu0 %v515
        %v1591 = vpop.f32.mrb[0].mxu0
        %v1592 = vadd.f32 %v1335, %v1591
        %v1593 = vpop.f32.mrb[0].mxu0
        %v1594 = vadd.f32 %v1337, %v1593
        %1595 = vmatprep.mubr.f32.mxu0 %v524
        %1596 = vmatmul.mubr.f32.gmra.mrb[0].mxu0 %v523
        %v1597 = vpop.f32.mrb[0].mxu0
        %v1598 = vadd.f32 %v1341, %v1597
        %v1599 = vpop.f32.mrb[0].mxu0
        %v1600 = vadd.f32 %v1343, %v1599
        %1601 = vmatprep.mubr.f32.mxu0 %v532
        %1602 = vmatmul.mubr.f32.gmra.mrb[0].mxu0 %v531
        %v1603 = vpop.f32.mrb[0].mxu0
        %v1604 = vadd.f32 %v1347, %v1603
        %v1605 = vpop.f32.mrb[0].mxu0
        %v1606 = vadd.f32 %v1349, %v1605
        %1607 = vmatprep.mubr.f32.mxu0 %v540
        %1608 = vmatmul.mubr.f32.gmra.mrb[0].mxu0 %v539
        %v1609 = vpop.f32.mrb[0].mxu0
        %v1610 = vadd.f32 %v1353, %v1609
        %v1611 = vpop.f32.mrb[0].mxu0
        %v1612 = vadd.f32 %v1355, %v1611
        %1613 = vmatprep.mubr.f32.mxu0 %v548
        %1614 = vmatmul.mubr.f32.gmra.mrb[0].mxu0 %v547
        %v1615 = vpop.f32.mrb[0].mxu0
        %v1616 = vadd.f32 %v1359, %v1615
        %v1617 = vpop.f32.mrb[0].mxu0
        %v1618 = vadd.f32 %v1361, %v1617
        %1619 = vmatprep.mubr.f32.mxu0 %v556
        %1620 = vmatmul.mubr.f32.gmra.mrb[0].mxu0 %v555
        %v1621 = vpop.f32.mrb[0].mxu0
        %v1622 = vadd.f32 %v1365, %v1621
        %v1623 = vpop.f32.mrb[0].mxu0
        %v1624 = vadd.f32 %v1367, %v1623
        %1625 = vmatprep.mubr.f32.mxu0 %v564
        %1626 = vmatmul.mubr.f32.gmra.mrb[0].mxu0 %v563
        %v1627 = vpop.f32.mrb[0].mxu0
        %v1628 = vadd.f32 %v1371, %v1627
        %v1629 = vpop.f32.mrb[0].mxu0
        %v1630 = vadd.f32 %v1373, %v1629
        %1631 = vmatprep.mubr.f32.mxu0 %v572
        %1632 = vmatmul.mubr.f32.gmra.mrb[0].mxu0 %v571
        %v1633 = vpop.f32.mrb[0].mxu0
        %v1634 = vadd.f32 %v1377, %v1633
        %v1635 = vpop.f32.mrb[0].mxu0
        %v1636 = vadd.f32 %v1379, %v1635
        %1637 = vmatprep.mubr.f32.mxu0 %v580
        %1638 = vmatmul.mubr.f32.gmra.mrb[0].mxu0 %v579
        %v1639 = vpop.f32.mrb[0].mxu0
        %v1640 = vadd.f32 %v1383, %v1639
        %v1641 = vpop.f32.mrb[0].mxu0
        %v1642 = vadd.f32 %v1385, %v1641
        %1643 = vmatprep.mubr.f32.mxu0 %v588
        %1644 = vmatmul.mubr.f32.gmra.mrb[0].mxu0 %v587
        %v1645 = vpop.f32.mrb[0].mxu0
        %v1646 = vadd.f32 %v1389, %v1645
        %v1647 = vpop.f32.mrb[0].mxu0
        %v1648 = vadd.f32 %v1391, %v1647
        %1649 = vmatprep.mubr.f32.mxu0 %v596
        %1650 = vmatmul.mubr.f32.gmra.mrb[0].mxu0 %v595
        %v1651 = vpop.f32.mrb[0].mxu0
        %v1652 = vadd.f32 %v1395, %v1651
        %v1653 = vpop.f32.mrb[0].mxu0
        %v1654 = vadd.f32 %v1397, %v1653
        %1655 = vmatprep.mubr.f32.mxu0 %v604
        %1656 = vmatmul.mubr.f32.gmra.mrb[0].mxu0 %v603
        %v1657 = vpop.f32.mrb[0].mxu0
        %v1658 = vadd.f32 %v1401, %v1657
        %v1659 = vpop.f32.mrb[0].mxu0
        %v1660 = vadd.f32 %v1403, %v1659
        %1661 = vmatprep.mubr.f32.mxu0 %v612
        %1662 = vmatmul.mubr.f32.gmra.mrb[0].mxu0 %v611
        %v1663 = vpop.f32.mrb[0].mxu0
        %v1664 = vadd.f32 %v1407, %v1663
        %v1665 = vpop.f32.mrb[0].mxu0
        %v1666 = vadd.f32 %v1409, %v1665
        %1667 = vmatprep.mubr.f32.mxu0 %v620
        %1668 = vmatmul.mubr.f32.gmra.mrb[0].mxu0 %v619
        %v1669 = vpop.f32.mrb[0].mxu0
        %v1670 = vadd.f32 %v1413, %v1669
        %v1671 = vpop.f32.mrb[0].mxu0
        %v1672 = vadd.f32 %v1415, %v1671
        %1673 = vmatprep.mubr.f32.mxu0 %v628
        %1674 = vmatmul.mubr.f32.gmra.mrb[0].mxu0 %v627
        %v1675 = vpop.f32.mrb[0].mxu0
        %v1676 = vadd.f32 %v1419, %v1675
        %v1677 = vpop.f32.mrb[0].mxu0
        %v1678 = vadd.f32 %v1421, %v1677
        %1679 = vmatprep.mubr.f32.mxu0 %v636
        %1680 = vmatmul.mubr.f32.gmra.mrb[0].mxu0 %v635
        %v1681 = vpop.f32.mrb[0].mxu0
        %v1682 = vadd.f32 %v1425, %v1681
        %v1683 = vpop.f32.mrb[0].mxu0
        %v1684 = vadd.f32 %v1427, %v1683
        %1685 = vmatprep.mubr.f32.mxu0 %v644
        %1686 = vmatmul.mubr.f32.gmra.mrb[0].mxu0 %v643
        %v1687 = vpop.f32.mrb[0].mxu0
        %v1688 = vadd.f32 %v1431, %v1687
        %v1689 = vpop.f32.mrb[0].mxu0
        %v1690 = vadd.f32 %v1433, %v1689
        %1691 = vmatprep.mubr.f32.mxu0 %v652
        %1692 = vmatmul.mubr.f32.gmra.mrb[0].mxu0 %v651
        %v1693 = vpop.f32.mrb[0].mxu0
        %v1694 = vadd.f32 %v1437, %v1693
        %v1695 = vpop.f32.mrb[0].mxu0
        %v1696 = vadd.f32 %v1439, %v1695
        %1697 = vmatprep.mubr.f32.mxu0 %v660
        %1698 = vmatmul.mubr.f32.gmra.mrb[0].mxu0 %v659
        %v1699 = vpop.f32.mrb[0].mxu0
        %v1700 = vadd.f32 %v1443, %v1699
        %v1701 = vpop.f32.mrb[0].mxu0
        %v1702 = vadd.f32 %v1445, %v1701
        %1703 = vmatprep.mubr.f32.mxu0 %v668
        %1704 = vmatmul.mubr.f32.gmra.mrb[0].mxu0 %v667
        %v1705 = vpop.f32.mrb[0].mxu0
        %v1706 = vadd.f32 %v1449, %v1705
        %v1707 = vpop.f32.mrb[0].mxu0
        %v1708 = vadd.f32 %v1451, %v1707
        %1709 = vmatprep.mubr.f32.mxu0 %v676
        %1710 = vmatmul.mubr.f32.gmra.mrb[0].mxu0 %v675
        %v1711 = vpop.f32.mrb[0].mxu0
        %v1712 = vadd.f32 %v1455, %v1711
        %v1713 = vpop.f32.mrb[0].mxu0
        %v1714 = vadd.f32 %v1457, %v1713
        %1715 = vmatprep.mubr.f32.mxu0 %v684
        %1716 = vmatmul.mubr.f32.gmra.mrb[0].mxu0 %v683
        %v1717 = vpop.f32.mrb[0].mxu0
        %v1718 = vadd.f32 %v1461, %v1717
        %v1719 = vpop.f32.mrb[0].mxu0
        %v1720 = vadd.f32 %v1463, %v1719
        %1721 = vmatprep.mubr.f32.mxu0 %v692
        %1722 = vmatmul.mubr.f32.gmra.mrb[0].mxu0 %v691
        %v1723 = vpop.f32.mrb[0].mxu0
        %v1724 = vadd.f32 %v1467, %v1723
        %v1725 = vpop.f32.mrb[0].mxu0
        %v1726 = vadd.f32 %v1469, %v1725
        %1727 = vmatprep.mubr.f32.mxu0 %v700
        %1728 = vmatmul.mubr.f32.gmra.mrb[0].mxu0 %v699
        %v1729 = vpop.f32.mrb[0].mxu0
        %v1730 = vadd.f32 %v1473, %v1729
        %v1731 = vpop.f32.mrb[0].mxu0
        %v1732 = vadd.f32 %v1475, %v1731
        %1733 = vmatprep.mubr.f32.mxu0 %v708
        %1734 = vmatmul.mubr.f32.gmra.mrb[0].mxu0 %v707
        %v1735 = vpop.f32.mrb[0].mxu0
        %v1736 = vadd.f32 %v1479, %v1735
        %v1737 = vpop.f32.mrb[0].mxu0
        %v1738 = vadd.f32 %v1481, %v1737
        %1739 = vmatprep.mubr.f32.mxu0 %v716
        %1740 = vmatmul.mubr.f32.gmra.mrb[0].mxu0 %v715
        %v1741 = vpop.f32.mrb[0].mxu0
        %v1742 = vadd.f32 %v1485, %v1741
        %v1743 = vpop.f32.mrb[0].mxu0
        %v1744 = vadd.f32 %v1487, %v1743
        %1745 = vdwg.mxu0
        %1746 = vmatprep.subr.mxu0 %v912
        %1747 = vmatpush1.msra.mxu0 %v911
        %1748 = vmatprep.subr.mxu0 %v914
        %1749 = vmatpush1.msra.mxu0 %v913
        %1750 = vmatprep.subr.mxu0 %v916
        %1751 = vmatpush1.msra.mxu0 %v915
        %1752 = vmatprep.subr.mxu0 %v918
        %1753 = vmatpush1.msra.mxu0 %v917
        %1754 = vmatprep.subr.mxu0 %v920
        %1755 = vmatpush1.msra.mxu0 %v919
        %1756 = vmatprep.subr.mxu0 %v922
        %1757 = vmatpush1.msra.mxu0 %v921
        %1758 = vmatprep.subr.mxu0 %v924
        %1759 = vmatpush1.msra.mxu0 %v923
        %1760 = vmatprep.subr.mxu0 %v926
        %1761 = vmatpush1.msra.mxu0 %v925
        %1762 = vmatprep.subr.mxu0 %v928
        %1763 = vmatpush1.msra.mxu0 %v927
        %1764 = vmatprep.subr.mxu0 %v930
        %1765 = vmatpush1.msra.mxu0 %v929
        %1766 = vmatprep.subr.mxu0 %v932
        %1767 = vmatpush1.msra.mxu0 %v931
        %1768 = vmatprep.subr.mxu0 %v934
        %1769 = vmatpush1.msra.mxu0 %v933
        %1770 = vmatprep.subr.mxu0 %v936
        %1771 = vmatpush1.msra.mxu0 %v935
        %1772 = vmatprep.subr.mxu0 %v938
        %1773 = vmatpush1.msra.mxu0 %v937
        %1774 = vmatprep.subr.mxu0 %v940
        %1775 = vmatpush1.msra.mxu0 %v939
        %1776 = vmatprep.subr.mxu0 %v942
        %1777 = vmatpush1.msra.mxu0 %v941
        %1778 = vmatprep.subr.mxu0 %v944
        %1779 = vmatpush1.msra.mxu0 %v943
        %1780 = vmatprep.subr.mxu0 %v946
        %1781 = vmatpush1.msra.mxu0 %v945
        %1782 = vmatprep.subr.mxu0 %v948
        %1783 = vmatpush1.msra.mxu0 %v947
        %1784 = vmatprep.subr.mxu0 %v950
        %1785 = vmatpush1.msra.mxu0 %v949
        %1786 = vmatprep.subr.mxu0 %v952
        %1787 = vmatpush1.msra.mxu0 %v951
        %1788 = vmatprep.subr.mxu0 %v954
        %1789 = vmatpush1.msra.mxu0 %v953
        %1790 = vmatprep.subr.mxu0 %v956
        %1791 = vmatpush1.msra.mxu0 %v955
        %1792 = vmatprep.subr.mxu0 %v958
        %1793 = vmatpush1.msra.mxu0 %v957
        %1794 = vmatprep.subr.mxu0 %v960
        %1795 = vmatpush1.msra.mxu0 %v959
        %1796 = vmatprep.subr.mxu0 %v962
        %1797 = vmatpush1.msra.mxu0 %v961
        %1798 = vmatprep.subr.mxu0 %v964
        %1799 = vmatpush1.msra.mxu0 %v963
        %1800 = vmatprep.subr.mxu0 %v966
        %1801 = vmatpush1.msra.mxu0 %v965
        %1802 = vmatprep.subr.mxu0 %v968
        %1803 = vmatpush1.msra.mxu0 %v967
        %1804 = vmatprep.subr.mxu0 %v970
        %1805 = vmatpush1.msra.mxu0 %v969
        %1806 = vmatprep.subr.mxu0 %v972
        %1807 = vmatpush1.msra.mxu0 %v971
        %1808 = vmatprep.subr.mxu0 %v974
        %1809 = vmatpush1.msra.mxu0 %v973
        %1810 = vmatprep.mubr.f32.mxu0 %v470
        %1811 = vmatmul.mubr.f32.gmra.mrb[0].mxu0 %v469
        %v1812 = vpop.f32.mrb[0].mxu0
        %v1813 = vadd.f32 %v1556, %v1812
        %v1814 = vpop.f32.mrb[0].mxu0
        %v1815 = vadd.f32 %v1558, %v1814
        %1816 = vmatprep.mubr.f32.mxu0 %v478
        %1817 = vmatmul.mubr.f32.gmra.mrb[0].mxu0 %v477
        %v1818 = vpop.f32.mrb[0].mxu0
        %v1819 = vadd.f32 %v1562, %v1818
        %v1820 = vpop.f32.mrb[0].mxu0
        %v1821 = vadd.f32 %v1564, %v1820
        %1822 = vmatprep.mubr.f32.mxu0 %v486
        %1823 = vmatmul.mubr.f32.gmra.mrb[0].mxu0 %v485
        %v1824 = vpop.f32.mrb[0].mxu0
        %v1825 = vadd.f32 %v1568, %v1824
        %v1826 = vpop.f32.mrb[0].mxu0
        %v1827 = vadd.f32 %v1570, %v1826
        %1828 = vmatprep.mubr.f32.mxu0 %v494
        %1829 = vmatmul.mubr.f32.gmra.mrb[0].mxu0 %v493
        %v1830 = vpop.f32.mrb[0].mxu0
        %v1831 = vadd.f32 %v1574, %v1830
        %v1832 = vpop.f32.mrb[0].mxu0
        %v1833 = vadd.f32 %v1576, %v1832
        %1834 = vmatprep.mubr.f32.mxu0 %v502
        %1835 = vmatmul.mubr.f32.gmra.mrb[0].mxu0 %v501
        %v1836 = vpop.f32.mrb[0].mxu0
        %v1837 = vadd.f32 %v1580, %v1836
        %v1838 = vpop.f32.mrb[0].mxu0
        %v1839 = vadd.f32 %v1582, %v1838
        %1840 = vmatprep.mubr.f32.mxu0 %v510
        %1841 = vmatmul.mubr.f32.gmra.mrb[0].mxu0 %v509
        %v1842 = vpop.f32.mrb[0].mxu0
        %v1843 = vadd.f32 %v1586, %v1842
        %v1844 = vpop.f32.mrb[0].mxu0
        %v1845 = vadd.f32 %v1588, %v1844
        %1846 = vmatprep.mubr.f32.mxu0 %v518
        %1847 = vmatmul.mubr.f32.gmra.mrb[0].mxu0 %v517
        %v1848 = vpop.f32.mrb[0].mxu0
        %v1849 = vadd.f32 %v1592, %v1848
        %v1850 = vpop.f32.mrb[0].mxu0
        %v1851 = vadd.f32 %v1594, %v1850
        %1852 = vmatprep.mubr.f32.mxu0 %v526
        %1853 = vmatmul.mubr.f32.gmra.mrb[0].mxu0 %v525
        %v1854 = vpop.f32.mrb[0].mxu0
        %v1855 = vadd.f32 %v1598, %v1854
        %v1856 = vpop.f32.mrb[0].mxu0
        %v1857 = vadd.f32 %v1600, %v1856
        %1858 = vmatprep.mubr.f32.mxu0 %v534
        %1859 = vmatmul.mubr.f32.gmra.mrb[0].mxu0 %v533
        %v1860 = vpop.f32.mrb[0].mxu0
        %v1861 = vadd.f32 %v1604, %v1860
        %v1862 = vpop.f32.mrb[0].mxu0
        %v1863 = vadd.f32 %v1606, %v1862
        %1864 = vmatprep.mubr.f32.mxu0 %v542
        %1865 = vmatmul.mubr.f32.gmra.mrb[0].mxu0 %v541
        %v1866 = vpop.f32.mrb[0].mxu0
        %v1867 = vadd.f32 %v1610, %v1866
        %v1868 = vpop.f32.mrb[0].mxu0
        %v1869 = vadd.f32 %v1612, %v1868
        %1870 = vmatprep.mubr.f32.mxu0 %v550
        %1871 = vmatmul.mubr.f32.gmra.mrb[0].mxu0 %v549
        %v1872 = vpop.f32.mrb[0].mxu0
        %v1873 = vadd.f32 %v1616, %v1872
        %v1874 = vpop.f32.mrb[0].mxu0
        %v1875 = vadd.f32 %v1618, %v1874
        %1876 = vmatprep.mubr.f32.mxu0 %v558
        %1877 = vmatmul.mubr.f32.gmra.mrb[0].mxu0 %v557
        %v1878 = vpop.f32.mrb[0].mxu0
        %v1879 = vadd.f32 %v1622, %v1878
        %v1880 = vpop.f32.mrb[0].mxu0
        %v1881 = vadd.f32 %v1624, %v1880
        %1882 = vmatprep.mubr.f32.mxu0 %v566
        %1883 = vmatmul.mubr.f32.gmra.mrb[0].mxu0 %v565
        %v1884 = vpop.f32.mrb[0].mxu0
        %v1885 = vadd.f32 %v1628, %v1884
        %v1886 = vpop.f32.mrb[0].mxu0
        %v1887 = vadd.f32 %v1630, %v1886
        %1888 = vmatprep.mubr.f32.mxu0 %v574
        %1889 = vmatmul.mubr.f32.gmra.mrb[0].mxu0 %v573
        %v1890 = vpop.f32.mrb[0].mxu0
        %v1891 = vadd.f32 %v1634, %v1890
        %v1892 = vpop.f32.mrb[0].mxu0
        %v1893 = vadd.f32 %v1636, %v1892
        %1894 = vmatprep.mubr.f32.mxu0 %v582
        %1895 = vmatmul.mubr.f32.gmra.mrb[0].mxu0 %v581
        %v1896 = vpop.f32.mrb[0].mxu0
        %v1897 = vadd.f32 %v1640, %v1896
        %v1898 = vpop.f32.mrb[0].mxu0
        %v1899 = vadd.f32 %v1642, %v1898
        %1900 = vmatprep.mubr.f32.mxu0 %v590
        %1901 = vmatmul.mubr.f32.gmra.mrb[0].mxu0 %v589
        %v1902 = vpop.f32.mrb[0].mxu0
        %v1903 = vadd.f32 %v1646, %v1902
        %v1904 = vpop.f32.mrb[0].mxu0
        %v1905 = vadd.f32 %v1648, %v1904
        %1906 = vmatprep.mubr.f32.mxu0 %v598
        %1907 = vmatmul.mubr.f32.gmra.mrb[0].mxu0 %v597
        %v1908 = vpop.f32.mrb[0].mxu0
        %v1909 = vadd.f32 %v1652, %v1908
        %v1910 = vpop.f32.mrb[0].mxu0
        %v1911 = vadd.f32 %v1654, %v1910
        %1912 = vmatprep.mubr.f32.mxu0 %v606
        %1913 = vmatmul.mubr.f32.gmra.mrb[0].mxu0 %v605
        %v1914 = vpop.f32.mrb[0].mxu0
        %v1915 = vadd.f32 %v1658, %v1914
        %v1916 = vpop.f32.mrb[0].mxu0
        %v1917 = vadd.f32 %v1660, %v1916
        %1918 = vmatprep.mubr.f32.mxu0 %v614
        %1919 = vmatmul.mubr.f32.gmra.mrb[0].mxu0 %v613
        %v1920 = vpop.f32.mrb[0].mxu0
        %v1921 = vadd.f32 %v1664, %v1920
        %v1922 = vpop.f32.mrb[0].mxu0
        %v1923 = vadd.f32 %v1666, %v1922
        %1924 = vmatprep.mubr.f32.mxu0 %v622
        %1925 = vmatmul.mubr.f32.gmra.mrb[0].mxu0 %v621
        %v1926 = vpop.f32.mrb[0].mxu0
        %v1927 = vadd.f32 %v1670, %v1926
        %v1928 = vpop.f32.mrb[0].mxu0
        %v1929 = vadd.f32 %v1672, %v1928
        %1930 = vmatprep.mubr.f32.mxu0 %v630
        %1931 = vmatmul.mubr.f32.gmra.mrb[0].mxu0 %v629
        %v1932 = vpop.f32.mrb[0].mxu0
        %v1933 = vadd.f32 %v1676, %v1932
        %v1934 = vpop.f32.mrb[0].mxu0
        %v1935 = vadd.f32 %v1678, %v1934
        %1936 = vmatprep.mubr.f32.mxu0 %v638
        %1937 = vmatmul.mubr.f32.gmra.mrb[0].mxu0 %v637
        %v1938 = vpop.f32.mrb[0].mxu0
        %v1939 = vadd.f32 %v1682, %v1938
        %v1940 = vpop.f32.mrb[0].mxu0
        %v1941 = vadd.f32 %v1684, %v1940
        %1942 = vmatprep.mubr.f32.mxu0 %v646
        %1943 = vmatmul.mubr.f32.gmra.mrb[0].mxu0 %v645
        %v1944 = vpop.f32.mrb[0].mxu0
        %v1945 = vadd.f32 %v1688, %v1944
        %v1946 = vpop.f32.mrb[0].mxu0
        %v1947 = vadd.f32 %v1690, %v1946
        %1948 = vmatprep.mubr.f32.mxu0 %v654
        %1949 = vmatmul.mubr.f32.gmra.mrb[0].mxu0 %v653
        %v1950 = vpop.f32.mrb[0].mxu0
        %v1951 = vadd.f32 %v1694, %v1950
        %v1952 = vpop.f32.mrb[0].mxu0
        %v1953 = vadd.f32 %v1696, %v1952
        %1954 = vmatprep.mubr.f32.mxu0 %v662
        %1955 = vmatmul.mubr.f32.gmra.mrb[0].mxu0 %v661
        %v1956 = vpop.f32.mrb[0].mxu0
        %v1957 = vadd.f32 %v1700, %v1956
        %v1958 = vpop.f32.mrb[0].mxu0
        %v1959 = vadd.f32 %v1702, %v1958
        %1960 = vmatprep.mubr.f32.mxu0 %v670
        %1961 = vmatmul.mubr.f32.gmra.mrb[0].mxu0 %v669
        %v1962 = vpop.f32.mrb[0].mxu0
        %v1963 = vadd.f32 %v1706, %v1962
        %v1964 = vpop.f32.mrb[0].mxu0
        %v1965 = vadd.f32 %v1708, %v1964
        %1966 = vmatprep.mubr.f32.mxu0 %v678
        %1967 = vmatmul.mubr.f32.gmra.mrb[0].mxu0 %v677
        %v1968 = vpop.f32.mrb[0].mxu0
        %v1969 = vadd.f32 %v1712, %v1968
        %v1970 = vpop.f32.mrb[0].mxu0
        %v1971 = vadd.f32 %v1714, %v1970
        %1972 = vmatprep.mubr.f32.mxu0 %v686
        %1973 = vmatmul.mubr.f32.gmra.mrb[0].mxu0 %v685
        %v1974 = vpop.f32.mrb[0].mxu0
        %v1975 = vadd.f32 %v1718, %v1974
        %v1976 = vpop.f32.mrb[0].mxu0
        %v1977 = vadd.f32 %v1720, %v1976
        %1978 = vmatprep.mubr.f32.mxu0 %v694
        %1979 = vmatmul.mubr.f32.gmra.mrb[0].mxu0 %v693
        %v1980 = vpop.f32.mrb[0].mxu0
        %v1981 = vadd.f32 %v1724, %v1980
        %v1982 = vpop.f32.mrb[0].mxu0
        %v1983 = vadd.f32 %v1726, %v1982
        %1984 = vmatprep.mubr.f32.mxu0 %v702
        %1985 = vmatmul.mubr.f32.gmra.mrb[0].mxu0 %v701
        %v1986 = vpop.f32.mrb[0].mxu0
        %v1987 = vadd.f32 %v1730, %v1986
        %v1988 = vpop.f32.mrb[0].mxu0
        %v1989 = vadd.f32 %v1732, %v1988
        %1990 = vmatprep.mubr.f32.mxu0 %v710
        %1991 = vmatmul.mubr.f32.gmra.mrb[0].mxu0 %v709
        %v1992 = vpop.f32.mrb[0].mxu0
        %v1993 = vadd.f32 %v1736, %v1992
        %v1994 = vpop.f32.mrb[0].mxu0
        %v1995 = vadd.f32 %v1738, %v1994
        %1996 = vmatprep.mubr.f32.mxu0 %v718
        %1997 = vmatmul.mubr.f32.gmra.mrb[0].mxu0 %v717
        %v1998 = vpop.f32.mrb[0].mxu0
        %v1999 = vadd.f32 %v1742, %v1998
        %v2000 = vpop.f32.mrb[0].mxu0
        %v2001 = vadd.f32 %v1744, %v2000
        %2002 = vdwg.mxu0
        %v2003 = vadd.f32 %v399, %v1813
        %v2004 = vadd.f32 %v400, %v1815
        %v2005 = vadd.f32 %v401, %v1819
        %v2006 = vadd.f32 %v402, %v1821
        %v2007 = vadd.f32 %v403, %v1825
        %v2008 = vadd.f32 %v404, %v1827
        %v2009 = vadd.f32 %v405, %v1831
        %v2010 = vadd.f32 %v406, %v1833
        %v2011 = vadd.f32 %v407, %v1837
        %v2012 = vadd.f32 %v408, %v1839
        %v2013 = vadd.f32 %v409, %v1843
        %v2014 = vadd.f32 %v410, %v1845
        %v2015 = vadd.f32 %v411, %v1849
        %v2016 = vadd.f32 %v412, %v1851
        %v2017 = vadd.f32 %v413, %v1855
        %v2018 = vadd.f32 %v414, %v1857
        %v2019 = vadd.f32 %v415, %v1861
        %v2020 = vadd.f32 %v416, %v1863
        %v2021 = vadd.f32 %v417, %v1867
        %v2022 = vadd.f32 %v418, %v1869
        %v2023 = vadd.f32 %v419, %v1873
        %v2024 = vadd.f32 %v420, %v1875
        %v2025 = vadd.f32 %v421, %v1879
        %v2026 = vadd.f32 %v422, %v1881
        %v2027 = vadd.f32 %v423, %v1885
        %v2028 = vadd.f32 %v424, %v1887
        %v2029 = vadd.f32 %v425, %v1891
        %v2030 = vadd.f32 %v426, %v1893
        %v2031 = vadd.f32 %v427, %v1897
        %v2032 = vadd.f32 %v428, %v1899
        %v2033 = vadd.f32 %v429, %v1903
        %v2034 = vadd.f32 %v430, %v1905
        %v2035 = vadd.f32 %v431, %v1909
        %v2036 = vadd.f32 %v432, %v1911
        %v2037 = vadd.f32 %v433, %v1915
        %v2038 = vadd.f32 %v434, %v1917
        %v2039 = vadd.f32 %v435, %v1921
        %v2040 = vadd.f32 %v436, %v1923
        %v2041 = vadd.f32 %v437, %v1927
        %v2042 = vadd.f32 %v438, %v1929
        %v2043 = vadd.f32 %v439, %v1933
        %v2044 = vadd.f32 %v440, %v1935
        %v2045 = vadd.f32 %v441, %v1939
        %v2046 = vadd.f32 %v442, %v1941
        %v2047 = vadd.f32 %v443, %v1945
        %v2048 = vadd.f32 %v444, %v1947
        %v2049 = vadd.f32 %v445, %v1951
        %v2050 = vadd.f32 %v446, %v1953
        %v2051 = vadd.f32 %v447, %v1957
        %v2052 = vadd.f32 %v448, %v1959
        %v2053 = vadd.f32 %v449, %v1963
        %v2054 = vadd.f32 %v450, %v1965
        %v2055 = vadd.f32 %v451, %v1969
        %v2056 = vadd.f32 %v452, %v1971
        %v2057 = vadd.f32 %v453, %v1975
        %v2058 = vadd.f32 %v454, %v1977
        %v2059 = vadd.f32 %v455, %v1981
        %v2060 = vadd.f32 %v456, %v1983
        %v2061 = vadd.f32 %v457, %v1987
        %v2062 = vadd.f32 %v458, %v1989
        %v2063 = vadd.f32 %v459, %v1993
        %v2064 = vadd.f32 %v460, %v1995
        %v2065 = vadd.f32 %v461, %v1999
        %v2066 = vadd.f32 %v462, %v2001
        %2067 = vst [vmem:[#allocation2] sm:$0xff] %v2003
        %2068 = vst [vmem:[#allocation2 + $0x8] sm:$0xff] %v2004
        %2069 = vst [vmem:[#allocation2 + $0x10] sm:$0xff] %v2005
        %2070 = vst [vmem:[#allocation2 + $0x18] sm:$0xff] %v2006
        %2071 = vst [vmem:[#allocation2 + $0x20] sm:$0xff] %v2007
        %2072 = vst [vmem:[#allocation2 + $0x28] sm:$0xff] %v2008
        %2073 = vst [vmem:[#allocation2 + $0x30] sm:$0xff] %v2009
        %2074 = vst [vmem:[#allocation2 + $0x38] sm:$0xff] %v2010
        %2075 = vst [vmem:[#allocation2 + $0x40] sm:$0xff] %v2011
        %2076 = vst [vmem:[#allocation2 + $0x48] sm:$0xff] %v2012
        %2077 = vst [vmem:[#allocation2 + $0x50] sm:$0xff] %v2013
        %2078 = vst [vmem:[#allocation2 + $0x58] sm:$0xff] %v2014
        %2079 = vst [vmem:[#allocation2 + $0x60] sm:$0xff] %v2015
        %2080 = vst [vmem:[#allocation2 + $0x68] sm:$0xff] %v2016
        %2081 = vst [vmem:[#allocation2 + $0x70] sm:$0xff] %v2017
        %2082 = vst [vmem:[#allocation2 + $0x78] sm:$0xff] %v2018
        %2083 = vst [vmem:[#allocation2 + $0x80] sm:$0xff] %v2019
        %2084 = vst [vmem:[#allocation2 + $0x88] sm:$0xff] %v2020
        %2085 = vst [vmem:[#allocation2 + $0x90] sm:$0xff] %v2021
        %2086 = vst [vmem:[#allocation2 + $0x98] sm:$0xff] %v2022
        %2087 = vst [vmem:[#allocation2 + $0xa0] sm:$0xff] %v2023
        %2088 = vst [vmem:[#allocation2 + $0xa8] sm:$0xff] %v2024
        %2089 = vst [vmem:[#allocation2 + $0xb0] sm:$0xff] %v2025
        %2090 = vst [vmem:[#allocation2 + $0xb8] sm:$0xff] %v2026
        %2091 = vst [vmem:[#allocation2 + $0xc0] sm:$0xff] %v2027
        %2092 = vst [vmem:[#allocation2 + $0xc8] sm:$0xff] %v2028
        %2093 = vst [vmem:[#allocation2 + $0xd0] sm:$0xff] %v2029
        %2094 = vst [vmem:[#allocation2 + $0xd8] sm:$0xff] %v2030
        %2095 = vst [vmem:[#allocation2 + $0xe0] sm:$0xff] %v2031
        %2096 = vst [vmem:[#allocation2 + $0xe8] sm:$0xff] %v2032
        %2097 = vst [vmem:[#allocation2 + $0xf0] sm:$0xff] %v2033
        %2098 = vst [vmem:[#allocation2 + $0xf8] sm:$0xff] %v2034
        %2099 = vst [vmem:[#allocation2 + $0x100] sm:$0xff] %v2035
        %2100 = vst [vmem:[#allocation2 + $0x108] sm:$0xff] %v2036
        %2101 = vst [vmem:[#allocation2 + $0x110] sm:$0xff] %v2037
        %2102 = vst [vmem:[#allocation2 + $0x118] sm:$0xff] %v2038
        %2103 = vst [vmem:[#allocation2 + $0x120] sm:$0xff] %v2039
        %2104 = vst [vmem:[#allocation2 + $0x128] sm:$0xff] %v2040
        %2105 = vst [vmem:[#allocation2 + $0x130] sm:$0xff] %v2041
        %2106 = vst [vmem:[#allocation2 + $0x138] sm:$0xff] %v2042
        %2107 = vst [vmem:[#allocation2 + $0x140] sm:$0xff] %v2043
        %2108 = vst [vmem:[#allocation2 + $0x148] sm:$0xff] %v2044
        %2109 = vst [vmem:[#allocation2 + $0x150] sm:$0xff] %v2045
        %2110 = vst [vmem:[#allocation2 + $0x158] sm:$0xff] %v2046
        %2111 = vst [vmem:[#allocation2 + $0x160] sm:$0xff] %v2047
        %2112 = vst [vmem:[#allocation2 + $0x168] sm:$0xff] %v2048
        %2113 = vst [vmem:[#allocation2 + $0x170] sm:$0xff] %v2049
        %2114 = vst [vmem:[#allocation2 + $0x178] sm:$0xff] %v2050
        %2115 = vst [vmem:[#allocation2 + $0x180] sm:$0xff] %v2051
        %2116 = vst [vmem:[#allocation2 + $0x188] sm:$0xff] %v2052
        %2117 = vst [vmem:[#allocation2 + $0x190] sm:$0xff] %v2053
        %2118 = vst [vmem:[#allocation2 + $0x198] sm:$0xff] %v2054
        %2119 = vst [vmem:[#allocation2 + $0x1a0] sm:$0xff] %v2055
        %2120 = vst [vmem:[#allocation2 + $0x1a8] sm:$0xff] %v2056
        %2121 = vst [vmem:[#allocation2 + $0x1b0] sm:$0xff] %v2057
        %2122 = vst [vmem:[#allocation2 + $0x1b8] sm:$0xff] %v2058
        %2123 = vst [vmem:[#allocation2 + $0x1c0] sm:$0xff] %v2059
        %2124 = vst [vmem:[#allocation2 + $0x1c8] sm:$0xff] %v2060
        %2125 = vst [vmem:[#allocation2 + $0x1d0] sm:$0xff] %v2061
        %2126 = vst [vmem:[#allocation2 + $0x1d8] sm:$0xff] %v2062
        %2127 = vst [vmem:[#allocation2 + $0x1e0] sm:$0xff] %v2063
        %2128 = vst [vmem:[#allocation2 + $0x1e8] sm:$0xff] %v2064
        %2129 = vst [vmem:[#allocation2 + $0x1f0] sm:$0xff] %v2065
        %2130 = vst [vmem:[#allocation2 + $0x1f8] sm:$0xff] %v2066
        // Predicated region
        $region61: #{tpu_custom_call.1} parent=39 // pred_check
          %p2131 = pneg %p331
        $region62: #{tpu_custom_call.1} parent=39 // pred_check_branch
          %2133 = sbr.rel (%p2131) target = $region64
        $region63: #{tpu_custom_call.1} parent=39 // pred_region
          %v2134 = vld [vmem:[#allocation2] sm:$0xff]
          %v2135 = vld [vmem:[#allocation2 + $0x8] sm:$0xff]
          %v2136 = vld [vmem:[#allocation2 + $0x10] sm:$0xff]
          %v2137 = vld [vmem:[#allocation2 + $0x18] sm:$0xff]
          %v2138 = vld [vmem:[#allocation2 + $0x20] sm:$0xff]
          %v2139 = vld [vmem:[#allocation2 + $0x28] sm:$0xff]
          %v2140 = vld [vmem:[#allocation2 + $0x30] sm:$0xff]
          %v2141 = vld [vmem:[#allocation2 + $0x38] sm:$0xff]
          %v2142 = vld [vmem:[#allocation2 + $0x40] sm:$0xff]
          %v2143 = vld [vmem:[#allocation2 + $0x48] sm:$0xff]
          %v2144 = vld [vmem:[#allocation2 + $0x50] sm:$0xff]
          %v2145 = vld [vmem:[#allocation2 + $0x58] sm:$0xff]
          %v2146 = vld [vmem:[#allocation2 + $0x60] sm:$0xff]
          %v2147 = vld [vmem:[#allocation2 + $0x68] sm:$0xff]
          %v2148 = vld [vmem:[#allocation2 + $0x70] sm:$0xff]
          %v2149 = vld [vmem:[#allocation2 + $0x78] sm:$0xff]
          %v2150 = vld [vmem:[#allocation2 + $0x80] sm:$0xff]
          %v2151 = vld [vmem:[#allocation2 + $0x88] sm:$0xff]
          %v2152 = vld [vmem:[#allocation2 + $0x90] sm:$0xff]
          %v2153 = vld [vmem:[#allocation2 + $0x98] sm:$0xff]
          %v2154 = vld [vmem:[#allocation2 + $0xa0] sm:$0xff]
          %v2155 = vld [vmem:[#allocation2 + $0xa8] sm:$0xff]
          %v2156 = vld [vmem:[#allocation2 + $0xb0] sm:$0xff]
          %v2157 = vld [vmem:[#allocation2 + $0xb8] sm:$0xff]
          %v2158 = vld [vmem:[#allocation2 + $0xc0] sm:$0xff]
          %v2159 = vld [vmem:[#allocation2 + $0xc8] sm:$0xff]
          %v2160 = vld [vmem:[#allocation2 + $0xd0] sm:$0xff]
          %v2161 = vld [vmem:[#allocation2 + $0xd8] sm:$0xff]
          %v2162 = vld [vmem:[#allocation2 + $0xe0] sm:$0xff]
          %v2163 = vld [vmem:[#allocation2 + $0xe8] sm:$0xff]
          %v2164 = vld [vmem:[#allocation2 + $0xf0] sm:$0xff]
          %v2165 = vld [vmem:[#allocation2 + $0xf8] sm:$0xff]
          %v2166 = vld [vmem:[#allocation2 + $0x100] sm:$0xff]
          %v2167 = vld [vmem:[#allocation2 + $0x108] sm:$0xff]
          %v2168 = vld [vmem:[#allocation2 + $0x110] sm:$0xff]
          %v2169 = vld [vmem:[#allocation2 + $0x118] sm:$0xff]
          %v2170 = vld [vmem:[#allocation2 + $0x120] sm:$0xff]
          %v2171 = vld [vmem:[#allocation2 + $0x128] sm:$0xff]
          %v2172 = vld [vmem:[#allocation2 + $0x130] sm:$0xff]
          %v2173 = vld [vmem:[#allocation2 + $0x138] sm:$0xff]
          %v2174 = vld [vmem:[#allocation2 + $0x140] sm:$0xff]
          %v2175 = vld [vmem:[#allocation2 + $0x148] sm:$0xff]
          %v2176 = vld [vmem:[#allocation2 + $0x150] sm:$0xff]
          %v2177 = vld [vmem:[#allocation2 + $0x158] sm:$0xff]
          %v2178 = vld [vmem:[#allocation2 + $0x160] sm:$0xff]
          %v2179 = vld [vmem:[#allocation2 + $0x168] sm:$0xff]
          %v2180 = vld [vmem:[#allocation2 + $0x170] sm:$0xff]
          %v2181 = vld [vmem:[#allocation2 + $0x178] sm:$0xff]
          %v2182 = vld [vmem:[#allocation2 + $0x180] sm:$0xff]
          %v2183 = vld [vmem:[#allocation2 + $0x188] sm:$0xff]
          %v2184 = vld [vmem:[#allocation2 + $0x190] sm:$0xff]
          %v2185 = vld [vmem:[#allocation2 + $0x198] sm:$0xff]
          %v2186 = vld [vmem:[#allocation2 + $0x1a0] sm:$0xff]
          %v2187 = vld [vmem:[#allocation2 + $0x1a8] sm:$0xff]
          %v2188 = vld [vmem:[#allocation2 + $0x1b0] sm:$0xff]
          %v2189 = vld [vmem:[#allocation2 + $0x1b8] sm:$0xff]
          %v2190 = vld [vmem:[#allocation2 + $0x1c0] sm:$0xff]
          %v2191 = vld [vmem:[#allocation2 + $0x1c8] sm:$0xff]
          %v2192 = vld [vmem:[#allocation2 + $0x1d0] sm:$0xff]
          %v2193 = vld [vmem:[#allocation2 + $0x1d8] sm:$0xff]
          %v2194 = vld [vmem:[#allocation2 + $0x1e0] sm:$0xff]
          %v2195 = vld [vmem:[#allocation2 + $0x1e8] sm:$0xff]
          %v2196 = vld [vmem:[#allocation2 + $0x1f0] sm:$0xff]
          %v2197 = vld [vmem:[#allocation2 + $0x1f8] sm:$0xff]
          %v2198 = vld [vmem:[#allocation9] sm:$0x3]
          %v2200 = vlaneseq
          %v2201 = vshrl.u32 %v2200, 7
          %v2202 = vsub.s32 0, %v2201
          %v2203 = vrot.slane %v2198, %v2202
          %v2204 = vlaneseq
          %v2205 = vshrl.u32 %v2204, 7
          %v2206 = vsub.s32 1, %v2205
          %v2207 = vrot.slane %v2198, %v2206
          %v2210 = vadd.f32 %v2134, %v2203
          %v2211 = vadd.f32 %v2135, %v2207
          %v2212 = vadd.f32 %v2136, %v2203
          %v2213 = vadd.f32 %v2137, %v2207
          %v2214 = vadd.f32 %v2138, %v2203
          %v2215 = vadd.f32 %v2139, %v2207
          %v2216 = vadd.f32 %v2140, %v2203
          %v2217 = vadd.f32 %v2141, %v2207
          %v2218 = vadd.f32 %v2142, %v2203
          %v2219 = vadd.f32 %v2143, %v2207
          %v2220 = vadd.f32 %v2144, %v2203
          %v2221 = vadd.f32 %v2145, %v2207
          %v2222 = vadd.f32 %v2146, %v2203
          %v2223 = vadd.f32 %v2147, %v2207
          %v2224 = vadd.f32 %v2148, %v2203
          %v2225 = vadd.f32 %v2149, %v2207
          %v2226 = vadd.f32 %v2150, %v2203
          %v2227 = vadd.f32 %v2151, %v2207
          %v2228 = vadd.f32 %v2152, %v2203
          %v2229 = vadd.f32 %v2153, %v2207
          %v2230 = vadd.f32 %v2154, %v2203
          %v2231 = vadd.f32 %v2155, %v2207
          %v2232 = vadd.f32 %v2156, %v2203
          %v2233 = vadd.f32 %v2157, %v2207
          %v2234 = vadd.f32 %v2158, %v2203
          %v2235 = vadd.f32 %v2159, %v2207
          %v2236 = vadd.f32 %v2160, %v2203
          %v2237 = vadd.f32 %v2161, %v2207
          %v2238 = vadd.f32 %v2162, %v2203
          %v2239 = vadd.f32 %v2163, %v2207
          %v2240 = vadd.f32 %v2164, %v2203
          %v2241 = vadd.f32 %v2165, %v2207
          %v2242 = vadd.f32 %v2166, %v2203
          %v2243 = vadd.f32 %v2167, %v2207
          %v2244 = vadd.f32 %v2168, %v2203
          %v2245 = vadd.f32 %v2169, %v2207
          %v2246 = vadd.f32 %v2170, %v2203
          %v2247 = vadd.f32 %v2171, %v2207
          %v2248 = vadd.f32 %v2172, %v2203
          %v2249 = vadd.f32 %v2173, %v2207
          %v2250 = vadd.f32 %v2174, %v2203
          %v2251 = vadd.f32 %v2175, %v2207
          %v2252 = vadd.f32 %v2176, %v2203
          %v2253 = vadd.f32 %v2177, %v2207
          %v2254 = vadd.f32 %v2178, %v2203
          %v2255 = vadd.f32 %v2179, %v2207
          %v2256 = vadd.f32 %v2180, %v2203
          %v2257 = vadd.f32 %v2181, %v2207
          %v2258 = vadd.f32 %v2182, %v2203
          %v2259 = vadd.f32 %v2183, %v2207
          %v2260 = vadd.f32 %v2184, %v2203
          %v2261 = vadd.f32 %v2185, %v2207
          %v2262 = vadd.f32 %v2186, %v2203
          %v2263 = vadd.f32 %v2187, %v2207
          %v2264 = vadd.f32 %v2188, %v2203
          %v2265 = vadd.f32 %v2189, %v2207
          %v2266 = vadd.f32 %v2190, %v2203
          %v2267 = vadd.f32 %v2191, %v2207
          %v2268 = vadd.f32 %v2192, %v2203
          %v2269 = vadd.f32 %v2193, %v2207
          %v2270 = vadd.f32 %v2194, %v2203
          %v2271 = vadd.f32 %v2195, %v2207
          %v2272 = vadd.f32 %v2196, %v2203
          %v2273 = vadd.f32 %v2197, %v2207
          %v2274 = vtanh.pop %v2210
          %v2275 = vtanh.pop %v2211
          %v2276 = vtanh.pop %v2212
          %v2277 = vtanh.pop %v2213
          %v2278 = vtanh.pop %v2214
          %v2279 = vtanh.pop %v2215
          %v2280 = vtanh.pop %v2216
          %v2281 = vtanh.pop %v2217
          %v2282 = vtanh.pop %v2218
          %v2283 = vtanh.pop %v2219
          %v2284 = vtanh.pop %v2220
          %v2285 = vtanh.pop %v2221
          %v2286 = vtanh.pop %v2222
          %v2287 = vtanh.pop %v2223
          %v2288 = vtanh.pop %v2224
          %v2289 = vtanh.pop %v2225
          %v2290 = vtanh.pop %v2226
          %v2291 = vtanh.pop %v2227
          %v2292 = vtanh.pop %v2228
          %v2293 = vtanh.pop %v2229
          %v2294 = vtanh.pop %v2230
          %v2295 = vtanh.pop %v2231
          %v2296 = vtanh.pop %v2232
          %v2297 = vtanh.pop %v2233
          %v2298 = vtanh.pop %v2234
          %v2299 = vtanh.pop %v2235
          %v2300 = vtanh.pop %v2236
          %v2301 = vtanh.pop %v2237
          %v2302 = vtanh.pop %v2238
          %v2303 = vtanh.pop %v2239
          %v2304 = vtanh.pop %v2240
          %v2305 = vtanh.pop %v2241
          %v2306 = vtanh.pop %v2242
          %v2307 = vtanh.pop %v2243
          %v2308 = vtanh.pop %v2244
          %v2309 = vtanh.pop %v2245
          %v2310 = vtanh.pop %v2246
          %v2311 = vtanh.pop %v2247
          %v2312 = vtanh.pop %v2248
          %v2313 = vtanh.pop %v2249
          %v2314 = vtanh.pop %v2250
          %v2315 = vtanh.pop %v2251
          %v2316 = vtanh.pop %v2252
          %v2317 = vtanh.pop %v2253
          %v2318 = vtanh.pop %v2254
          %v2319 = vtanh.pop %v2255
          %v2320 = vtanh.pop %v2256
          %v2321 = vtanh.pop %v2257
          %v2322 = vtanh.pop %v2258
          %v2323 = vtanh.pop %v2259
          %v2324 = vtanh.pop %v2260
          %v2325 = vtanh.pop %v2261
          %v2326 = vtanh.pop %v2262
          %v2327 = vtanh.pop %v2263
          %v2328 = vtanh.pop %v2264
          %v2329 = vtanh.pop %v2265
          %v2330 = vtanh.pop %v2266
          %v2331 = vtanh.pop %v2267
          %v2332 = vtanh.pop %v2268
          %v2333 = vtanh.pop %v2269
          %v2334 = vtanh.pop %v2270
          %v2335 = vtanh.pop %v2271
          %v2336 = vtanh.pop %v2272
          %v2337 = vtanh.pop %v2273
          %v2338 = vld [vmem:[#allocation10] sm:$0x3]
          %v2339 = vld [vmem:[#allocation3] sm:$0x1]
          %2341 = vset.pattern.permute.xlu0 0
          %2342 = vperm.xlu0 %2341, %v2339
          %v2343 = vpop.permute.xlu0 %2342
          %v2345 = vlaneseq
          %v2346 = vshrl.u32 %v2345, 7
          %v2347 = vsub.s32 0, %v2346
          %v2348 = vrot.slane %v2343, %v2347
          %v2350 = vlaneseq
          %v2351 = vshrl.u32 %v2350, 7
          %v2352 = vsub.s32 0, %v2351
          %v2353 = vrot.slane %v2338, %v2352
          %v2354 = vlaneseq
          %v2355 = vshrl.u32 %v2354, 7
          %v2356 = vsub.s32 1, %v2355
          %v2357 = vrot.slane %v2338, %v2356
          %2360 = vmatprep.subr.mxu0 %v2275
          %2361 = vmatpush1.xpose.msra.mxu0 %v2274
          %2362 = vmatprep.subr.mxu0 %v2277
          %2363 = vmatpush1.xpose.msra.mxu0 %v2276
          %2364 = vmatprep.subr.mxu0 %v2279
          %2365 = vmatpush1.xpose.msra.mxu0 %v2278
          %2366 = vmatprep.subr.mxu0 %v2281
          %2367 = vmatpush1.xpose.msra.mxu0 %v2280
          %2368 = vmatprep.subr.mxu0 %v2283
          %2369 = vmatpush1.xpose.msra.mxu0 %v2282
          %2370 = vmatprep.subr.mxu0 %v2285
          %2371 = vmatpush1.xpose.msra.mxu0 %v2284
          %2372 = vmatprep.subr.mxu0 %v2287
          %2373 = vmatpush1.xpose.msra.mxu0 %v2286
          %2374 = vmatprep.subr.mxu0 %v2289
          %2375 = vmatpush1.xpose.msra.mxu0 %v2288
          %2376 = vmatprep.subr.mxu0 %v2291
          %2377 = vmatpush1.xpose.msra.mxu0 %v2290
          %2378 = vmatprep.subr.mxu0 %v2293
          %2379 = vmatpush1.xpose.msra.mxu0 %v2292
          %2380 = vmatprep.subr.mxu0 %v2295
          %2381 = vmatpush1.xpose.msra.mxu0 %v2294
          %2382 = vmatprep.subr.mxu0 %v2297
          %2383 = vmatpush1.xpose.msra.mxu0 %v2296
          %2384 = vmatprep.subr.mxu0 %v2299
          %2385 = vmatpush1.xpose.msra.mxu0 %v2298
          %2386 = vmatprep.subr.mxu0 %v2301
          %2387 = vmatpush1.xpose.msra.mxu0 %v2300
          %2388 = vmatprep.subr.mxu0 %v2303
          %2389 = vmatpush1.xpose.msra.mxu0 %v2302
          %2390 = vmatprep.subr.mxu0 %v2305
          %2391 = vmatpush1.xpose.msra.mxu0 %v2304
          %2392 = vmatprep.subr.mxu0 %v2307
          %2393 = vmatpush1.xpose.msra.mxu0 %v2306
          %2394 = vmatprep.subr.mxu0 %v2309
          %2395 = vmatpush1.xpose.msra.mxu0 %v2308
          %2396 = vmatprep.subr.mxu0 %v2311
          %2397 = vmatpush1.xpose.msra.mxu0 %v2310
          %2398 = vmatprep.subr.mxu0 %v2313
          %2399 = vmatpush1.xpose.msra.mxu0 %v2312
          %2400 = vmatprep.subr.mxu0 %v2315
          %2401 = vmatpush1.xpose.msra.mxu0 %v2314
          %2402 = vmatprep.subr.mxu0 %v2317
          %2403 = vmatpush1.xpose.msra.mxu0 %v2316
          %2404 = vmatprep.subr.mxu0 %v2319
          %2405 = vmatpush1.xpose.msra.mxu0 %v2318
          %2406 = vmatprep.subr.mxu0 %v2321
          %2407 = vmatpush1.xpose.msra.mxu0 %v2320
          %2408 = vmatprep.subr.mxu0 %v2323
          %2409 = vmatpush1.xpose.msra.mxu0 %v2322
          %2410 = vmatprep.subr.mxu0 %v2325
          %2411 = vmatpush1.xpose.msra.mxu0 %v2324
          %2412 = vmatprep.subr.mxu0 %v2327
          %2413 = vmatpush1.xpose.msra.mxu0 %v2326
          %2414 = vmatprep.subr.mxu0 %v2329
          %2415 = vmatpush1.xpose.msra.mxu0 %v2328
          %2416 = vmatprep.subr.mxu0 %v2331
          %2417 = vmatpush1.xpose.msra.mxu0 %v2330
          %2418 = vmatprep.subr.mxu0 %v2333
          %2419 = vmatpush1.xpose.msra.mxu0 %v2332
          %2420 = vmatprep.subr.mxu0 %v2335
          %2421 = vmatpush1.xpose.msra.mxu0 %v2334
          %2422 = vmatprep.subr.mxu0 %v2337
          %2423 = vmatpush1.xpose.msra.mxu0 %v2336
          %2424 = vmatprep.mubr.f32.mxu0 %v2357
          %2425 = vmatmul.mubr.f32.gmra.mrb[0].mxu0 %v2353
          %v2426 = vpop.f32.mrb[0].mxu0
          %v2427 = vadd.f32 %v2348, %v2426
          %v2428 = vpop.f32.mrb[0].mxu0
          %v2429 = vadd.f32 %v2348, %v2428
          %2430 = vdwg.mxu0
          %v2433 = vcombine.low %v2427, %v2429
          %v2435 = vunpack.c.l.s4 1966171168
          %v2436 = vunpack.c.0.s8 %v2435
          %v2437 = vlaneseq
          %v2438 = vshrl.u32 %v2437, 7
          %v2439 = vsub.s32 %v2436, %v2438
          %v2440 = vrot.slane %v2433, %v2439
          %v2442 = vunpack.c.l.s4 1966171168
          %v2443 = vunpack.c.0.s8 %v2442
          %v2444 = vlaneseq
          %v2445 = vshrl.u32 %v2444, 7
          %v2446 = vsub.s32 %v2443, %v2445
          %v2447 = vrot.slane %v2440, %v2446
          %v2449 = vlaneseq
          %vm2450 = vcmp.ge.s32.totalorder %v2449, 0
          %vm2451 = vcmp.lt.s32.totalorder %v2449, 256
          %vm2452 = vmand %vm2450, %vm2451
          %2453 = vst.msk [vmem:[%s317] sm:$0x3] %vm2452, %v2447
        $region64: #{tpu_custom_call.1} parent=39 // pred_fallthru
          _
        %s2454 = sand.u32 %s163, 1
        %s2455 = scalar_lea.sflag [#allocation6], %s2454
        %s2456 = sand.u32 %s163, 1
        %s2457 = smul.addr %s2456, 2
        %s2458 = scalar_lea.vmem [#allocation12], %s2457
        // Predicated region
        $region65: #{tpu_custom_call.1} parent=39 // pred_check
          %p2459 = pneg %p173
        $region66: #{tpu_custom_call.1} parent=39 // pred_check_branch
          %2461 = sbr.rel (%p2459) target = $region68
        $region67: #{tpu_custom_call.1} parent=39 // pred_region
          %s2462 = smul.u32 2, %s30
          %s2463 = ssub.s32 3, %s2462
          %p2464 = scmp.lt.s32.totalorder %s2463, 2
          %s2465 = scalar_select %p2464, %s2463, 2
          %s2466 = smul.u32 16, %s2465
          %s2468 = ssub.s32 32, %s2466
          %2469 = vsyncadd %s2455, %s2468
          %p2470 = scmp.ne.s32.totalorder 0, %s2466
          %s2471 = smul.addr %s2462, 16
          %s2472 = scalar_lea.hbm %s5, %s2471
          %s2473 = sshll.u32 %s2465, 4
          %s2474 = sshll.u32 %s2458, 4
          %s2475 = int_to_ptr.vmem [resolvable:$true] %s2474
          %2477 = dma.vmem_to_hbm [thread:$0]  (%p2470), %s2475, %s2473, %s2472, %s2455
        $region68: #{tpu_custom_call.1} parent=39 // pred_fallthru
          _
      $region40: #{tpu_custom_call.1} parent=5 // pred_fallthru
        _
      %p2478 = scmp.le.s32.totalorder 2, %s21
      // Predicated region
      $region69: #{tpu_custom_call.1} parent=5 // pred_check
        %p2479 = pneg %p2478
      $region70: #{tpu_custom_call.1} parent=5 // pred_check_branch
        %2481 = sbr.rel (%p2479) target = $region72
      $region71: #{tpu_custom_call.1} parent=5 // pred_region
        %s2482 = ssub.s32 %s21, 2
        // Predicated region
        $region73: #{tpu_custom_call.1} parent=71 // pred_check
          %p2483 = pneg %p179
        $region74: #{tpu_custom_call.1} parent=71 // pred_check_branch
          %2485 = sbr.rel (%p2483) target = $region76
        $region75: #{tpu_custom_call.1} parent=71 // pred_region
          %s2486 = sand.u32 %s164, 1
          %s2487 = scalar_lea.sflag [#allocation6], %s2486
          %s2488 = sand.u32 %s164, 1
          %s2489 = smul.addr %s2488, 2
          %s2490 = scalar_lea.vmem [#allocation12], %s2489
          %2491 = dma.done %s2487, 32
        $region76: #{tpu_custom_call.1} parent=71 // pred_fallthru
          _
      $region72: #{tpu_custom_call.1} parent=5 // pred_fallthru
        _
    $region6: #{tpu_custom_call.1} parent=1 // loop_footer
      %s25 = sadd.s32 1, %s21
    $region7: #{tpu_custom_call.1} parent=1 // loop_footer_branch
      %20 = sbr.rel target = $region3
    $region8: #{tpu_custom_call.1} parent=1 // loop_exit
      _
    %2492 = vsyncpa [#allocation5], 1
    %s2493 = scalar_lea.sflag [#allocation5], 1
    %2494 = vsyncpa %s2493, 1
    %2495 = vsyncpa [#allocation8], 1
    %2496 = vsyncpa [#allocation11], 1
    %2497 = vsyncpa [#allocation6], 1
    %s2498 = scalar_lea.sflag [#allocation6], 1
    %2499 = vsyncpa %s2498, 1

</llo_original>
